<compile_context>
chip_gen: v6e
topology: v6e:2x2x1
jax: 0.10.0
libtpu: 0.0.40
codegen_flags: <defaults>
</compile_context>

<pallas_src>
import functools

import jax
import jax.numpy as jnp
from jax.experimental import pallas as pl
from jax.experimental.pallas import tpu as pltpu

H, W = 7, 7
KH, KW = 3, 3
CIN, COUT = 192, 48
HP, WP = H + 2, W + 2          # spatially padded dims (padding=1)
B_MAX = 64                      # max images per grid step

_DN = (((2,), (0,)), ((), ()))  # contract last dim of lhs with first dim of rhs


def _relu_conv_kernel(x_ref, w_ref, o_ref, *, b_blk):
    # x_ref: (b_blk, HP, WP, CIN) bf16 -- already ReLU'd + zero padded in wrapper
    # w_ref: (KW, CIN, KH*COUT) bf16   -- kh folded into the matmul N dimension
    # o_ref: (b_blk, H, W, COUT) f32
    x3 = x_ref[...].reshape(b_blk * HP, WP, CIN)   # merge leading dims (layout no-op)

    # 3 dots (one per kw window): M = b_blk*HP*W, K = CIN, N = KH*COUT = 144,
    # f32 accumulation on the MXU.
    z = jax.lax.dot_general(x3[:, 0:W, :], w_ref[0], _DN,
                            preferred_element_type=jnp.float32)
    for kw in range(1, KW):
        z = z + jax.lax.dot_general(x3[:, kw:kw + W, :], w_ref[kw], _DN,
                                    preferred_element_type=jnp.float32)
    z = z.reshape(b_blk, HP, W, KH * COUT)         # split leading dim back (no-op)

    # Combine the kh taps: the three 48-lane groups, shifted-row adds on the
    # narrow f32 partials.
    acc = (z[:, 0:H, :, 0 * COUT:1 * COUT]
           + z[:, 1:1 + H, :, 1 * COUT:2 * COUT]
           + z[:, 2:2 + H, :, 2 * COUT:3 * COUT])
    o_ref[...] = acc.astype(o_ref.dtype)


def _pick_block(n):
    if n <= 1:
        return 1
    # >= 2 grid steps (keeps both v7x TensorCores busy via the "parallel" grid
    # axis) and a block size that minimizes dead padded images in the last
    # block: b_blk = cdiv(n, nblocks), nblocks = max(2, cdiv(n, B_MAX)).
    n_blocks = max(2, pl.cdiv(n, B_MAX))
    return pl.cdiv(n, n_blocks)


def relu_conv2d(x_nchw, w_oihw):
    """x_nchw: (N, 192, 7, 7) f32; w_oihw: (48, 192, 3, 3) f32 -> (N, 48, 7, 7) f32."""
    n = x_nchw.shape[0]
    b_blk = _pick_block(n)
    n_pad = pl.cdiv(n, b_blk) * b_blk

    # Single fused XLA pass: NCHW->NHWC transpose + ReLU + bf16 cast + batch pad
    # + spatial zero pad (ReLU(0)=0, so padding commutes with the ReLU).
    x_nhwc = jnp.maximum(jnp.transpose(x_nchw, (0, 2, 3, 1)), 0.0).astype(jnp.bfloat16)
    x_p = jnp.pad(x_nhwc, ((0, n_pad - n), (1, 1), (1, 1), (0, 0)))

    # OIHW -> (KW, CIN, KH*COUT) bf16: w_f[kw, ci, kh*COUT + co] = w[co, ci, kh, kw].
    w_f = jnp.transpose(w_oihw, (3, 1, 2, 0)).reshape(KW, CIN, KH * COUT)
    w_f = w_f.astype(jnp.bfloat16)

    out_nhwc = pl.pallas_call(
        functools.partial(_relu_conv_kernel, b_blk=b_blk),
        out_shape=jax.ShapeDtypeStruct((n_pad, H, W, COUT), x_nchw.dtype),
        grid=(n_pad // b_blk,),
        in_specs=[
            pl.BlockSpec((b_blk, HP, WP, CIN), lambda i: (i, 0, 0, 0)),
            # Constant index_map -> bf16 weights stay resident in VMEM.
            pl.BlockSpec((KW, CIN, KH * COUT), lambda i: (0, 0, 0)),
        ],
        out_specs=pl.BlockSpec((b_blk, H, W, COUT), lambda i: (i, 0, 0, 0)),
        compiler_params=pltpu.CompilerParams(
            dimension_semantics=("parallel",),
            vmem_limit_bytes=32 << 20),
    )(x_p, w_f)

    return jnp.transpose(out_nhwc[:n], (0, 3, 1, 2))


def _reference(x, w):
    return jax.lax.conv_general_dilated(
        jnp.maximum(x, 0.0), w,
        window_strides=(1, 1), padding=((1, 1), (1, 1)),
        dimension_numbers=("NCHW", "OIHW", "NCHW"))


if __name__ == "__main__":
    key = jax.random.PRNGKey(0)
    kx, kw, kxb = jax.random.split(key, 3)

    # Module's shapes: input (1, 192, 7, 7), Conv2d(192, 48, 3x3, pad=1, no bias).
    x = jax.random.normal(kx, (1, CIN, H, W), dtype=jnp.float32)
    fan_in = CIN * KH * KW
    bound = (1.0 / fan_in) ** 0.5
    w = jax.random.uniform(kw, (COUT, CIN, KH, KW), dtype=jnp.float32,
                           minval=-bound, maxval=bound)

    fn = jax.jit(relu_conv2d)

    out = jax.block_until_ready(fn(x, w))
    ref = _reference(x, w)
    assert out.shape == (1, COUT, H, W)
    assert jnp.allclose(out, ref, atol=2e-2, rtol=2e-2), \
        float(jnp.max(jnp.abs(out - ref)))

    # Exercise the batched + ragged-padding path (b_blk=3, grid=2, 1 dead image).
    xb = jax.random.normal(kxb, (5, CIN, H, W), dtype=jnp.float32)
    outb = jax.block_until_ready(fn(xb, w))
    refb = _reference(xb, w)
    assert outb.shape == (5, COUT, H, W)
    assert jnp.allclose(outb, refb, atol=2e-2, rtol=2e-2), \
        float(jnp.max(jnp.abs(outb - refb)))

    print("KERNEL_OK")
</pallas_src>

<mosaic_0001>
module attributes {stable_mosaic.version = 11 : i64} {
  func.func @_relu_conv_kernel(%arg0: i32, %arg1: memref<1x9x9x192xbf16, #tpu.memory_space<vmem>>, %arg2: memref<3x192x144xbf16, #tpu.memory_space<vmem>>, %arg3: memref<1x7x7x48xf32, #tpu.memory_space<vmem>>) attributes {dimension_semantics = [#tpu.dimension_semantics<parallel>], iteration_bounds = array<i64: 1>, scalar_prefetch = 0 : i64, scratch_operands = 0 : i64, tpu.core_type = #tpu.core_type<tc>, window_params = [{transform_indices = @transform_0, window_bounds = array<i64: 1, 9, 9, 192>}, {pipeline_mode = #tpu.pipeline_mode<synchronous>, transform_indices = @transform_1, window_bounds = array<i64: 3, 192, 144>}, {transform_indices = @transform_2, window_bounds = array<i64: 1, 7, 7, 48>}]} {
    %c0 = arith.constant 0 : index
    %c0_0 = arith.constant 0 : index
    %c0_1 = arith.constant 0 : index
    %c0_2 = arith.constant 0 : index
    %0 = vector.load %arg1[%c0, %c0_0, %c0_1, %c0_2] : memref<1x9x9x192xbf16, #tpu.memory_space<vmem>>, vector<1x9x9x192xbf16>
    %1 = vector.shape_cast %0 : vector<1x9x9x192xbf16> to vector<9x9x192xbf16>
    %2 = vector.extract_strided_slice %1 {offsets = [0, 0, 0], sizes = [9, 7, 192], strides = [1, 1, 1]} : vector<9x9x192xbf16> to vector<9x7x192xbf16>
    %c0_3 = arith.constant 0 : index
    %c0_4 = arith.constant 0 : index
    %c0_5 = arith.constant 0 : index
    %3 = vector.load %arg2[%c0_3, %c0_4, %c0_5] : memref<3x192x144xbf16, #tpu.memory_space<vmem>>, vector<1x192x144xbf16>
    %4 = vector.shape_cast %3 : vector<1x192x144xbf16> to vector<192x144xbf16>
    %cst = arith.constant dense<0.000000e+00> : vector<9x7x144xf32>
    %5 = tpu.matmul %2, %4, %cst {dimension_numbers = #tpu.dot_dimension_numbers<[2], [0], [0, 1], [1], [0, 0, 0, 1, 1, 1], [], []>} : vector<9x7x192xbf16>, vector<192x144xbf16>, vector<9x7x144xf32> -> vector<9x7x144xf32>
    %6 = vector.extract_strided_slice %1 {offsets = [0, 1, 0], sizes = [9, 7, 192], strides = [1, 1, 1]} : vector<9x9x192xbf16> to vector<9x7x192xbf16>
    %c1 = arith.constant 1 : index
    %c0_6 = arith.constant 0 : index
    %c0_7 = arith.constant 0 : index
    %7 = vector.load %arg2[%c1, %c0_6, %c0_7] : memref<3x192x144xbf16, #tpu.memory_space<vmem>>, vector<1x192x144xbf16>
    %8 = vector.shape_cast %7 : vector<1x192x144xbf16> to vector<192x144xbf16>
    %cst_8 = arith.constant dense<0.000000e+00> : vector<9x7x144xf32>
    %9 = tpu.matmul %6, %8, %cst_8 {dimension_numbers = #tpu.dot_dimension_numbers<[2], [0], [0, 1], [1], [0, 0, 0, 1, 1, 1], [], []>} : vector<9x7x192xbf16>, vector<192x144xbf16>, vector<9x7x144xf32> -> vector<9x7x144xf32>
    %10 = arith.addf %5, %9 : vector<9x7x144xf32>
    %11 = vector.extract_strided_slice %1 {offsets = [0, 2, 0], sizes = [9, 7, 192], strides = [1, 1, 1]} : vector<9x9x192xbf16> to vector<9x7x192xbf16>
    %c2 = arith.constant 2 : index
    %c0_9 = arith.constant 0 : index
    %c0_10 = arith.constant 0 : index
    %12 = vector.load %arg2[%c2, %c0_9, %c0_10] : memref<3x192x144xbf16, #tpu.memory_space<vmem>>, vector<1x192x144xbf16>
    %13 = vector.shape_cast %12 : vector<1x192x144xbf16> to vector<192x144xbf16>
    %cst_11 = arith.constant dense<0.000000e+00> : vector<9x7x144xf32>
    %14 = tpu.matmul %11, %13, %cst_11 {dimension_numbers = #tpu.dot_dimension_numbers<[2], [0], [0, 1], [1], [0, 0, 0, 1, 1, 1], [], []>} : vector<9x7x192xbf16>, vector<192x144xbf16>, vector<9x7x144xf32> -> vector<9x7x144xf32>
    %15 = arith.addf %10, %14 : vector<9x7x144xf32>
    %16 = vector.shape_cast %15 : vector<9x7x144xf32> to vector<1x9x7x144xf32>
    %17 = vector.extract_strided_slice %16 {offsets = [0, 0, 0, 0], sizes = [1, 7, 7, 48], strides = [1, 1, 1, 1]} : vector<1x9x7x144xf32> to vector<1x7x7x48xf32>
    %18 = vector.extract_strided_slice %16 {offsets = [0, 1, 0, 48], sizes = [1, 7, 7, 48], strides = [1, 1, 1, 1]} : vector<1x9x7x144xf32> to vector<1x7x7x48xf32>
    %19 = arith.addf %17, %18 : vector<1x7x7x48xf32>
    %20 = vector.extract_strided_slice %16 {offsets = [0, 2, 0, 96], sizes = [1, 7, 7, 48], strides = [1, 1, 1, 1]} : vector<1x9x7x144xf32> to vector<1x7x7x48xf32>
    %21 = arith.addf %19, %20 : vector<1x7x7x48xf32>
    %c0_12 = arith.constant 0 : index
    %c0_13 = arith.constant 0 : index
    %c0_14 = arith.constant 0 : index
    %c0_15 = arith.constant 0 : index
    %22 = vector.load %arg3[%c0_12, %c0_13, %c0_14, %c0_15] : memref<1x7x7x48xf32, #tpu.memory_space<vmem>>, vector<1x7x7x48xf32>
    tpu.vector_store %arg3[%c0_12, %c0_13, %c0_14, %c0_15], %21 {strides = array<i32>} : memref<1x7x7x48xf32, #tpu.memory_space<vmem>>, vector<1x7x7x48xf32>,
    return
  }
  func.func @transform_0(%arg0: i32) -> (i32, i32, i32, i32) {
    %c0_i32 = arith.constant 0 : i32
    %c0_i32_0 = arith.constant 0 : i32
    %c0_i32_1 = arith.constant 0 : i32
    %c0_i32_2 = arith.constant 0 : i32
    return %arg0, %c0_i32, %c0_i32_0, %c0_i32_1 : i32, i32, i32, i32
  }
  func.func @transform_1(%arg0: i32) -> (i32, i32, i32) {
    %c0_i32 = arith.constant 0 : i32
    %c0_i32_0 = arith.constant 0 : i32
    %c0_i32_1 = arith.constant 0 : i32
    %c0_i32_2 = arith.constant 0 : i32
    return %c0_i32, %c0_i32_0, %c0_i32_1 : i32, i32, i32
  }
  func.func @transform_2(%arg0: i32) -> (i32, i32, i32, i32) {
    %c0_i32 = arith.constant 0 : i32
    %c0_i32_0 = arith.constant 0 : i32
    %c0_i32_1 = arith.constant 0 : i32
    %c0_i32_2 = arith.constant 0 : i32
    return %arg0, %c0_i32, %c0_i32_0, %c0_i32_1 : i32, i32, i32, i32
  }
}

</mosaic_0001>

<llo_original>
// kernel: relu_conv2d.1
$region0: #{relu_conv2d.1}
  #allocation0 [shape = 'u32[]', space=smem, size = 0x4, offset = 0x4, fixed_abs, tag = 'smem constant byte address 0x4 - core index']
  #allocation1 [shape = 'u32[144,128]{1,0:T(1,128)}', space=vmem, size = 0x12000, scoped, tag = 'internal scratch']
  %s0 = inlined_call_operand.vmem [shape: bf16[1,9,9,192], index: 0, kind: input, shape index: {}]
  %s1 = inlined_call_operand.vmem [shape: bf16[3,192,144], index: 1, kind: input, shape index: {}]
  %s2 = inlined_call_operand.vmem [shape: f32[1,7,7,48], index: 2, kind: output, shape index: {}]
  %s3 = sld [smem:[#allocation0]]
  $region18: #{relu_conv2d.1} parent=0
    _
  %s5 = ssub.s32 1, %s3
  %s6 = scalar_select 0, %s5, %s3
  // Predicated region
  $region2: #{relu_conv2d.1} parent=0 // pred_check
    _
  $region3: #{relu_conv2d.1} parent=0 // pred_check_branch
    %8 = sbr.rel (0) target = $region5
  $region4: #{relu_conv2d.1} parent=0 // pred_region
    _
  $region5: #{relu_conv2d.1} parent=0 // pred_fallthru
    _
  // Predicated region
  $region6: #{relu_conv2d.1} parent=0 // pred_check
    _
  $region7: #{relu_conv2d.1} parent=0 // pred_check_branch
    %10 = sbr.rel (0) target = $region9
  $region8: #{relu_conv2d.1} parent=0 // pred_region
    _
  $region9: #{relu_conv2d.1} parent=0 // pred_fallthru
    _
  %v12 = vld [vmem:[%s0] sm:$0xff]
  %v13 = vld [vmem:[%s0 + $0x8] sm:$0x11]
  %v14 = vld [vmem:[%s0 + $0x10] sm:$0xff]
  %v15 = vld [vmem:[%s0 + $0x18] sm:$0x11]
  %v16 = vld [vmem:[%s0 + $0x20] sm:$0xff]
  %v17 = vld [vmem:[%s0 + $0x28] sm:$0x11]
  %v18 = vld [vmem:[%s0 + $0x30] sm:$0xff]
  %v19 = vld [vmem:[%s0 + $0x38] sm:$0x11]
  %v20 = vld [vmem:[%s0 + $0x40] sm:$0xff]
  %v21 = vld [vmem:[%s0 + $0x48] sm:$0x11]
  %v22 = vld [vmem:[%s0 + $0x50] sm:$0xff]
  %v23 = vld [vmem:[%s0 + $0x58] sm:$0x11]
  %v24 = vld [vmem:[%s0 + $0x60] sm:$0xff]
  %v25 = vld [vmem:[%s0 + $0x68] sm:$0x11]
  %v26 = vld [vmem:[%s0 + $0x70] sm:$0xff]
  %v27 = vld [vmem:[%s0 + $0x78] sm:$0x11]
  %v28 = vld [vmem:[%s0 + $0x80] sm:$0xff]
  %v29 = vld [vmem:[%s0 + $0x88] sm:$0x11]
  %v30 = vld [vmem:[%s1] sm:$0xff]
  %v31 = vld [vmem:[%s1 + $0x8] sm:$0xff]
  %v32 = vld [vmem:[%s1 + $0x10] sm:$0xff]
  %v33 = vld [vmem:[%s1 + $0x18] sm:$0xff]
  %v34 = vld [vmem:[%s1 + $0x20] sm:$0xff]
  %v35 = vld [vmem:[%s1 + $0x28] sm:$0xff]
  %v36 = vld [vmem:[%s1 + $0x30] sm:$0xff]
  %v37 = vld [vmem:[%s1 + $0x38] sm:$0xff]
  %v38 = vld [vmem:[%s1 + $0x40] sm:$0xff]
  %v39 = vld [vmem:[%s1 + $0x48] sm:$0xff]
  %v40 = vld [vmem:[%s1 + $0x50] sm:$0xff]
  %v41 = vld [vmem:[%s1 + $0x58] sm:$0xff]
  %v42 = vld [vmem:[%s1 + $0x60] sm:$0xff]
  %v43 = vld [vmem:[%s1 + $0x68] sm:$0xff]
  %v44 = vld [vmem:[%s1 + $0x70] sm:$0xff]
  %v45 = vld [vmem:[%s1 + $0x78] sm:$0xff]
  %v46 = vld [vmem:[%s1 + $0x80] sm:$0xff]
  %v47 = vld [vmem:[%s1 + $0x88] sm:$0xff]
  %v48 = vld [vmem:[%s1 + $0x90] sm:$0xff]
  %v49 = vld [vmem:[%s1 + $0x98] sm:$0xff]
  %v50 = vld [vmem:[%s1 + $0xa0] sm:$0xff]
  %v51 = vld [vmem:[%s1 + $0xa8] sm:$0xff]
  %v52 = vld [vmem:[%s1 + $0xb0] sm:$0xff]
  %v53 = vld [vmem:[%s1 + $0xb8] sm:$0xff]
  %s54 = scalar_lea.vmem %s1, 192
  %v55 = vld [vmem:[%s54] sm:$0xff]
  %v56 = vld [vmem:[%s54 + $0x8] sm:$0xff]
  %v57 = vld [vmem:[%s54 + $0x10] sm:$0xff]
  %v58 = vld [vmem:[%s54 + $0x18] sm:$0xff]
  %v59 = vld [vmem:[%s54 + $0x20] sm:$0xff]
  %v60 = vld [vmem:[%s54 + $0x28] sm:$0xff]
  %v61 = vld [vmem:[%s54 + $0x30] sm:$0xff]
  %v62 = vld [vmem:[%s54 + $0x38] sm:$0xff]
  %v63 = vld [vmem:[%s54 + $0x40] sm:$0xff]
  %v64 = vld [vmem:[%s54 + $0x48] sm:$0xff]
  %v65 = vld [vmem:[%s54 + $0x50] sm:$0xff]
  %v66 = vld [vmem:[%s54 + $0x58] sm:$0xff]
  %v67 = vld [vmem:[%s54 + $0x60] sm:$0xff]
  %v68 = vld [vmem:[%s54 + $0x68] sm:$0xff]
  %v69 = vld [vmem:[%s54 + $0x70] sm:$0xff]
  %v70 = vld [vmem:[%s54 + $0x78] sm:$0xff]
  %v71 = vld [vmem:[%s54 + $0x80] sm:$0xff]
  %v72 = vld [vmem:[%s54 + $0x88] sm:$0xff]
  %v73 = vld [vmem:[%s54 + $0x90] sm:$0xff]
  %v74 = vld [vmem:[%s54 + $0x98] sm:$0xff]
  %v75 = vld [vmem:[%s54 + $0xa0] sm:$0xff]
  %v76 = vld [vmem:[%s54 + $0xa8] sm:$0xff]
  %v77 = vld [vmem:[%s54 + $0xb0] sm:$0xff]
  %v78 = vld [vmem:[%s54 + $0xb8] sm:$0xff]
  %v89 = vunpack.c.l.s4 1966171168
  %v90 = vunpack.c.0.s8 %v89
  %v91 = vlaneseq
  %v92 = vshrl.u32 %v91, 7
  %v93 = vsub.s32 %v90, %v92
  %v94 = vrot.slane %v12, %v93
  %v95 = vcombine.high %v94, %v94
  %v97 = vunpack.c.l.s4 1966171168
  %v98 = vunpack.c.0.s8 %v97
  %v99 = vlaneseq
  %v100 = vshrl.u32 %v99, 7
  %v101 = vsub.s32 %v98, %v100
  %v102 = vrot.slane %v94, %v101
  %v104 = vunpack.c.l.s4 1966171168
  %v105 = vunpack.c.0.s8 %v104
  %v106 = vlaneseq
  %v107 = vshrl.u32 %v106, 7
  %v108 = vsub.s32 %v105, %v107
  %v109 = vrot.slane %v95, %v108
  %v110 = vcombine.high %v102, %v102
  %v111 = vcombine.high %v109, %v109
  %v113 = vunpack.c.l.s4 1966171168
  %v114 = vunpack.c.0.s8 %v113
  %v115 = vlaneseq
  %v116 = vshrl.u32 %v115, 7
  %v117 = vsub.s32 %v114, %v116
  %v118 = vrot.slane %v14, %v117
  %v119 = vcombine.high %v118, %v118
  %v121 = vunpack.c.l.s4 1966171168
  %v122 = vunpack.c.0.s8 %v121
  %v123 = vlaneseq
  %v124 = vshrl.u32 %v123, 7
  %v125 = vsub.s32 %v122, %v124
  %v126 = vrot.slane %v118, %v125
  %v128 = vunpack.c.l.s4 1966171168
  %v129 = vunpack.c.0.s8 %v128
  %v130 = vlaneseq
  %v131 = vshrl.u32 %v130, 7
  %v132 = vsub.s32 %v129, %v131
  %v133 = vrot.slane %v119, %v132
  %v134 = vcombine.high %v126, %v126
  %v135 = vcombine.high %v133, %v133
  %v137 = vunpack.c.l.s4 1966171168
  %v138 = vunpack.c.0.s8 %v137
  %v139 = vlaneseq
  %v140 = vshrl.u32 %v139, 7
  %v141 = vsub.s32 %v138, %v140
  %v142 = vrot.slane %v16, %v141
  %v143 = vcombine.high %v142, %v142
  %v145 = vunpack.c.l.s4 1966171168
  %v146 = vunpack.c.0.s8 %v145
  %v147 = vlaneseq
  %v148 = vshrl.u32 %v147, 7
  %v149 = vsub.s32 %v146, %v148
  %v150 = vrot.slane %v142, %v149
  %v152 = vunpack.c.l.s4 1966171168
  %v153 = vunpack.c.0.s8 %v152
  %v154 = vlaneseq
  %v155 = vshrl.u32 %v154, 7
  %v156 = vsub.s32 %v153, %v155
  %v157 = vrot.slane %v143, %v156
  %v158 = vcombine.high %v150, %v150
  %v159 = vcombine.high %v157, %v157
  %v161 = vunpack.c.l.s4 1966171168
  %v162 = vunpack.c.0.s8 %v161
  %v163 = vlaneseq
  %v164 = vshrl.u32 %v163, 7
  %v165 = vsub.s32 %v162, %v164
  %v166 = vrot.slane %v18, %v165
  %v167 = vcombine.high %v166, %v166
  %v169 = vunpack.c.l.s4 1966171168
  %v170 = vunpack.c.0.s8 %v169
  %v171 = vlaneseq
  %v172 = vshrl.u32 %v171, 7
  %v173 = vsub.s32 %v170, %v172
  %v174 = vrot.slane %v166, %v173
  %v176 = vunpack.c.l.s4 1966171168
  %v177 = vunpack.c.0.s8 %v176
  %v178 = vlaneseq
  %v179 = vshrl.u32 %v178, 7
  %v180 = vsub.s32 %v177, %v179
  %v181 = vrot.slane %v167, %v180
  %v182 = vcombine.high %v174, %v174
  %v183 = vcombine.high %v181, %v181
  %v185 = vunpack.c.l.s4 1966171168
  %v186 = vunpack.c.0.s8 %v185
  %v187 = vlaneseq
  %v188 = vshrl.u32 %v187, 7
  %v189 = vsub.s32 %v186, %v188
  %v190 = vrot.slane %v20, %v189
  %v191 = vcombine.high %v190, %v190
  %v193 = vunpack.c.l.s4 1966171168
  %v194 = vunpack.c.0.s8 %v193
  %v195 = vlaneseq
  %v196 = vshrl.u32 %v195, 7
  %v197 = vsub.s32 %v194, %v196
  %v198 = vrot.slane %v190, %v197
  %v200 = vunpack.c.l.s4 1966171168
  %v201 = vunpack.c.0.s8 %v200
  %v202 = vlaneseq
  %v203 = vshrl.u32 %v202, 7
  %v204 = vsub.s32 %v201, %v203
  %v205 = vrot.slane %v191, %v204
  %v206 = vcombine.high %v198, %v198
  %v207 = vcombine.high %v205, %v205
  %v209 = vunpack.c.l.s4 1966171168
  %v210 = vunpack.c.0.s8 %v209
  %v211 = vlaneseq
  %v212 = vshrl.u32 %v211, 7
  %v213 = vsub.s32 %v210, %v212
  %v214 = vrot.slane %v22, %v213
  %v215 = vcombine.high %v214, %v214
  %v217 = vunpack.c.l.s4 1966171168
  %v218 = vunpack.c.0.s8 %v217
  %v219 = vlaneseq
  %v220 = vshrl.u32 %v219, 7
  %v221 = vsub.s32 %v218, %v220
  %v222 = vrot.slane %v214, %v221
  %v224 = vunpack.c.l.s4 1966171168
  %v225 = vunpack.c.0.s8 %v224
  %v226 = vlaneseq
  %v227 = vshrl.u32 %v226, 7
  %v228 = vsub.s32 %v225, %v227
  %v229 = vrot.slane %v215, %v228
  %v230 = vcombine.high %v222, %v222
  %v231 = vcombine.high %v229, %v229
  %v233 = vunpack.c.l.s4 1966171168
  %v234 = vunpack.c.0.s8 %v233
  %v235 = vlaneseq
  %v236 = vshrl.u32 %v235, 7
  %v237 = vsub.s32 %v234, %v236
  %v238 = vrot.slane %v24, %v237
  %v239 = vcombine.high %v238, %v238
  %v241 = vunpack.c.l.s4 1966171168
  %v242 = vunpack.c.0.s8 %v241
  %v243 = vlaneseq
  %v244 = vshrl.u32 %v243, 7
  %v245 = vsub.s32 %v242, %v244
  %v246 = vrot.slane %v238, %v245
  %v248 = vunpack.c.l.s4 1966171168
  %v249 = vunpack.c.0.s8 %v248
  %v250 = vlaneseq
  %v251 = vshrl.u32 %v250, 7
  %v252 = vsub.s32 %v249, %v251
  %v253 = vrot.slane %v239, %v252
  %v254 = vcombine.high %v246, %v246
  %v255 = vcombine.high %v253, %v253
  %v257 = vunpack.c.l.s4 1966171168
  %v258 = vunpack.c.0.s8 %v257
  %v259 = vlaneseq
  %v260 = vshrl.u32 %v259, 7
  %v261 = vsub.s32 %v258, %v260
  %v262 = vrot.slane %v26, %v261
  %v263 = vcombine.high %v262, %v262
  %v265 = vunpack.c.l.s4 1966171168
  %v266 = vunpack.c.0.s8 %v265
  %v267 = vlaneseq
  %v268 = vshrl.u32 %v267, 7
  %v269 = vsub.s32 %v266, %v268
  %v270 = vrot.slane %v262, %v269
  %v272 = vunpack.c.l.s4 1966171168
  %v273 = vunpack.c.0.s8 %v272
  %v274 = vlaneseq
  %v275 = vshrl.u32 %v274, 7
  %v276 = vsub.s32 %v273, %v275
  %v277 = vrot.slane %v263, %v276
  %v278 = vcombine.high %v270, %v270
  %v279 = vcombine.high %v277, %v277
  %v281 = vunpack.c.l.s4 1966171168
  %v282 = vunpack.c.0.s8 %v281
  %v283 = vlaneseq
  %v284 = vshrl.u32 %v283, 7
  %v285 = vsub.s32 %v282, %v284
  %v286 = vrot.slane %v28, %v285
  %v287 = vcombine.high %v286, %v286
  %v289 = vunpack.c.l.s4 1966171168
  %v290 = vunpack.c.0.s8 %v289
  %v291 = vlaneseq
  %v292 = vshrl.u32 %v291, 7
  %v293 = vsub.s32 %v290, %v292
  %v294 = vrot.slane %v286, %v293
  %v296 = vunpack.c.l.s4 1966171168
  %v297 = vunpack.c.0.s8 %v296
  %v298 = vlaneseq
  %v299 = vshrl.u32 %v298, 7
  %v300 = vsub.s32 %v297, %v299
  %v301 = vrot.slane %v287, %v300
  %v302 = vcombine.high %v294, %v294
  %v303 = vcombine.high %v301, %v301
  %v304 = vunpack.i.h.s16 %v102
  %v305 = vunpack.i.l.s16 %v109
  %v306 = vunpack.i.h.s16 %v109
  %v307 = vunpack.i.l.s16 %v110
  %v308 = vunpack.i.h.s16 %v110
  %v309 = vunpack.i.l.s16 %v111
  %v310 = vunpack.i.h.s16 %v111
  %v311 = vunpack.i.h.s16 %v126
  %v312 = vunpack.i.l.s16 %v133
  %v313 = vunpack.i.h.s16 %v133
  %v314 = vunpack.i.l.s16 %v134
  %v315 = vunpack.i.h.s16 %v134
  %v316 = vunpack.i.l.s16 %v135
  %v317 = vunpack.i.h.s16 %v135
  %v318 = vunpack.i.h.s16 %v150
  %v319 = vunpack.i.l.s16 %v157
  %v320 = vunpack.i.h.s16 %v157
  %v321 = vunpack.i.l.s16 %v158
  %v322 = vunpack.i.h.s16 %v158
  %v323 = vunpack.i.l.s16 %v159
  %v324 = vunpack.i.h.s16 %v159
  %v325 = vunpack.i.h.s16 %v174
  %v326 = vunpack.i.l.s16 %v181
  %v327 = vunpack.i.h.s16 %v181
  %v328 = vunpack.i.l.s16 %v182
  %v329 = vunpack.i.h.s16 %v182
  %v330 = vunpack.i.l.s16 %v183
  %v331 = vunpack.i.h.s16 %v183
  %v332 = vunpack.i.h.s16 %v198
  %v333 = vunpack.i.l.s16 %v205
  %v334 = vunpack.i.h.s16 %v205
  %v335 = vunpack.i.l.s16 %v206
  %v336 = vunpack.i.h.s16 %v206
  %v337 = vunpack.i.l.s16 %v207
  %v338 = vunpack.i.h.s16 %v207
  %v339 = vunpack.i.h.s16 %v222
  %v340 = vunpack.i.l.s16 %v229
  %v341 = vunpack.i.h.s16 %v229
  %v342 = vunpack.i.l.s16 %v230
  %v343 = vunpack.i.h.s16 %v230
  %v344 = vunpack.i.l.s16 %v231
  %v345 = vunpack.i.h.s16 %v231
  %v346 = vunpack.i.h.s16 %v246
  %v347 = vunpack.i.l.s16 %v253
  %v348 = vunpack.i.h.s16 %v253
  %v349 = vunpack.i.l.s16 %v254
  %v350 = vunpack.i.h.s16 %v254
  %v351 = vunpack.i.l.s16 %v255
  %v352 = vunpack.i.h.s16 %v255
  %v353 = vunpack.i.h.s16 %v270
  %v354 = vunpack.i.l.s16 %v277
  %v355 = vunpack.i.h.s16 %v277
  %v356 = vunpack.i.l.s16 %v278
  %v357 = vunpack.i.h.s16 %v278
  %v358 = vunpack.i.l.s16 %v279
  %v359 = vunpack.i.h.s16 %v279
  %v360 = vunpack.i.h.s16 %v294
  %v361 = vunpack.i.l.s16 %v301
  %v362 = vunpack.i.h.s16 %v301
  %v363 = vunpack.i.l.s16 %v302
  %v364 = vunpack.i.h.s16 %v302
  %v365 = vunpack.i.l.s16 %v303
  %v366 = vunpack.i.h.s16 %v303
  %v367 = vpack.i.b16 %v305, %v304
  %v368 = vpack.i.b16 %v307, %v306
  %v369 = vpack.i.b16 %v309, %v308
  %v370 = vpack.i.b16 %v311, %v310
  %v371 = vpack.i.b16 %v313, %v312
  %v372 = vpack.i.b16 %v315, %v314
  %v373 = vpack.i.b16 %v317, %v316
  %v374 = vpack.i.b16 %v319, %v318
  %v375 = vpack.i.b16 %v321, %v320
  %v376 = vpack.i.b16 %v323, %v322
  %v377 = vpack.i.b16 %v325, %v324
  %v378 = vpack.i.b16 %v327, %v326
  %v379 = vpack.i.b16 %v329, %v328
  %v380 = vpack.i.b16 %v331, %v330
  %v381 = vpack.i.b16 %v333, %v332
  %v382 = vpack.i.b16 %v335, %v334
  %v383 = vpack.i.b16 %v337, %v336
  %v384 = vpack.i.b16 %v339, %v338
  %v385 = vpack.i.b16 %v341, %v340
  %v386 = vpack.i.b16 %v343, %v342
  %v387 = vpack.i.b16 %v345, %v344
  %v388 = vpack.i.b16 %v347, %v346
  %v389 = vpack.i.b16 %v349, %v348
  %v390 = vpack.i.b16 %v351, %v350
  %v391 = vpack.i.b16 %v353, %v352
  %v392 = vpack.i.b16 %v355, %v354
  %v393 = vpack.i.b16 %v357, %v356
  %v394 = vpack.i.b16 %v359, %v358
  %v395 = vpack.i.b16 %v361, %v360
  %v396 = vpack.i.b16 %v363, %v362
  %v397 = vpack.i.b16 %v365, %v364
  %v399 = vcombine.low %v367, %v368
  %v400 = vcombine.low %v369, %v370
  %v401 = vcombine.low %v371, %v372
  %v402 = vcombine.low %v373, %v374
  %v404 = vunpack.c.l.s4 1966171168
  %v405 = vunpack.c.0.s8 %v404
  %v406 = vlaneseq
  %v407 = vshrl.u32 %v406, 7
  %v408 = vsub.s32 %v405, %v407
  %v409 = vrot.slane %v399, %v408
  %v411 = vunpack.c.l.s4 1966171168
  %v412 = vunpack.c.0.s8 %v411
  %v413 = vlaneseq
  %v414 = vshrl.u32 %v413, 7
  %v415 = vsub.s32 %v412, %v414
  %v416 = vrot.slane %v400, %v415
  %v418 = vunpack.c.l.s4 1966171168
  %v419 = vunpack.c.0.s8 %v418
  %v420 = vlaneseq
  %v421 = vshrl.u32 %v420, 7
  %v422 = vsub.s32 %v419, %v421
  %v423 = vrot.slane %v401, %v422
  %v425 = vunpack.c.l.s4 1966171168
  %v426 = vunpack.c.0.s8 %v425
  %v427 = vlaneseq
  %v428 = vshrl.u32 %v427, 7
  %v429 = vsub.s32 %v426, %v428
  %v430 = vrot.slane %v402, %v429
  %v431 = vcombine.low %v409, %v416
  %v432 = vcombine.high %v409, %v416
  %v433 = vcombine.low %v423, %v430
  %v434 = vcombine.high %v423, %v430
  %v436 = vunpack.c.l.s4 1966171168
  %v437 = vunpack.c.0.s8 %v436
  %v438 = vlaneseq
  %v439 = vshrl.u32 %v438, 7
  %v440 = vsub.s32 %v437, %v439
  %v441 = vrot.slane %v431, %v440
  %v443 = vunpack.c.l.s4 1966171168
  %v444 = vunpack.c.0.s8 %v443
  %v445 = vlaneseq
  %v446 = vshrl.u32 %v445, 7
  %v447 = vsub.s32 %v444, %v446
  %v448 = vrot.slane %v432, %v447
  %v450 = vunpack.c.l.s4 1966171168
  %v451 = vunpack.c.0.s8 %v450
  %v452 = vlaneseq
  %v453 = vshrl.u32 %v452, 7
  %v454 = vsub.s32 %v451, %v453
  %v455 = vrot.slane %v433, %v454
  %v457 = vunpack.c.l.s4 1966171168
  %v458 = vunpack.c.0.s8 %v457
  %v459 = vlaneseq
  %v460 = vshrl.u32 %v459, 7
  %v461 = vsub.s32 %v458, %v460
  %v462 = vrot.slane %v434, %v461
  %v463 = vcombine.low %v441, %v455
  %v464 = vcombine.low %v448, %v462
  %v465 = vcombine.low %v375, %v376
  %v466 = vcombine.low %v377, %v378
  %v467 = vcombine.low %v379, %v380
  %v468 = vcombine.low %v381, %v382
  %v470 = vunpack.c.l.s4 1966171168
  %v471 = vunpack.c.0.s8 %v470
  %v472 = vlaneseq
  %v473 = vshrl.u32 %v472, 7
  %v474 = vsub.s32 %v471, %v473
  %v475 = vrot.slane %v465, %v474
  %v477 = vunpack.c.l.s4 1966171168
  %v478 = vunpack.c.0.s8 %v477
  %v479 = vlaneseq
  %v480 = vshrl.u32 %v479, 7
  %v481 = vsub.s32 %v478, %v480
  %v482 = vrot.slane %v466, %v481
  %v484 = vunpack.c.l.s4 1966171168
  %v485 = vunpack.c.0.s8 %v484
  %v486 = vlaneseq
  %v487 = vshrl.u32 %v486, 7
  %v488 = vsub.s32 %v485, %v487
  %v489 = vrot.slane %v467, %v488
  %v491 = vunpack.c.l.s4 1966171168
  %v492 = vunpack.c.0.s8 %v491
  %v493 = vlaneseq
  %v494 = vshrl.u32 %v493, 7
  %v495 = vsub.s32 %v492, %v494
  %v496 = vrot.slane %v468, %v495
  %v497 = vcombine.low %v475, %v482
  %v498 = vcombine.high %v475, %v482
  %v499 = vcombine.low %v489, %v496
  %v500 = vcombine.high %v489, %v496
  %v502 = vunpack.c.l.s4 1966171168
  %v503 = vunpack.c.0.s8 %v502
  %v504 = vlaneseq
  %v505 = vshrl.u32 %v504, 7
  %v506 = vsub.s32 %v503, %v505
  %v507 = vrot.slane %v497, %v506
  %v509 = vunpack.c.l.s4 1966171168
  %v510 = vunpack.c.0.s8 %v509
  %v511 = vlaneseq
  %v512 = vshrl.u32 %v511, 7
  %v513 = vsub.s32 %v510, %v512
  %v514 = vrot.slane %v498, %v513
  %v516 = vunpack.c.l.s4 1966171168
  %v517 = vunpack.c.0.s8 %v516
  %v518 = vlaneseq
  %v519 = vshrl.u32 %v518, 7
  %v520 = vsub.s32 %v517, %v519
  %v521 = vrot.slane %v499, %v520
  %v523 = vunpack.c.l.s4 1966171168
  %v524 = vunpack.c.0.s8 %v523
  %v525 = vlaneseq
  %v526 = vshrl.u32 %v525, 7
  %v527 = vsub.s32 %v524, %v526
  %v528 = vrot.slane %v500, %v527
  %v529 = vcombine.low %v507, %v521
  %v530 = vcombine.low %v514, %v528
  %v531 = vcombine.low %v383, %v384
  %v532 = vcombine.low %v385, %v386
  %v533 = vcombine.low %v387, %v388
  %v534 = vcombine.low %v389, %v390
  %v536 = vunpack.c.l.s4 1966171168
  %v537 = vunpack.c.0.s8 %v536
  %v538 = vlaneseq
  %v539 = vshrl.u32 %v538, 7
  %v540 = vsub.s32 %v537, %v539
  %v541 = vrot.slane %v531, %v540
  %v543 = vunpack.c.l.s4 1966171168
  %v544 = vunpack.c.0.s8 %v543
  %v545 = vlaneseq
  %v546 = vshrl.u32 %v545, 7
  %v547 = vsub.s32 %v544, %v546
  %v548 = vrot.slane %v532, %v547
  %v550 = vunpack.c.l.s4 1966171168
  %v551 = vunpack.c.0.s8 %v550
  %v552 = vlaneseq
  %v553 = vshrl.u32 %v552, 7
  %v554 = vsub.s32 %v551, %v553
  %v555 = vrot.slane %v533, %v554
  %v557 = vunpack.c.l.s4 1966171168
  %v558 = vunpack.c.0.s8 %v557
  %v559 = vlaneseq
  %v560 = vshrl.u32 %v559, 7
  %v561 = vsub.s32 %v558, %v560
  %v562 = vrot.slane %v534, %v561
  %v563 = vcombine.low %v541, %v548
  %v564 = vcombine.high %v541, %v548
  %v565 = vcombine.low %v555, %v562
  %v566 = vcombine.high %v555, %v562
  %v568 = vunpack.c.l.s4 1966171168
  %v569 = vunpack.c.0.s8 %v568
  %v570 = vlaneseq
  %v571 = vshrl.u32 %v570, 7
  %v572 = vsub.s32 %v569, %v571
  %v573 = vrot.slane %v563, %v572
  %v575 = vunpack.c.l.s4 1966171168
  %v576 = vunpack.c.0.s8 %v575
  %v577 = vlaneseq
  %v578 = vshrl.u32 %v577, 7
  %v579 = vsub.s32 %v576, %v578
  %v580 = vrot.slane %v564, %v579
  %v582 = vunpack.c.l.s4 1966171168
  %v583 = vunpack.c.0.s8 %v582
  %v584 = vlaneseq
  %v585 = vshrl.u32 %v584, 7
  %v586 = vsub.s32 %v583, %v585
  %v587 = vrot.slane %v565, %v586
  %v589 = vunpack.c.l.s4 1966171168
  %v590 = vunpack.c.0.s8 %v589
  %v591 = vlaneseq
  %v592 = vshrl.u32 %v591, 7
  %v593 = vsub.s32 %v590, %v592
  %v594 = vrot.slane %v566, %v593
  %v595 = vcombine.low %v573, %v587
  %v596 = vcombine.low %v580, %v594
  %v597 = vcombine.low %v391, %v392
  %v598 = vcombine.low %v393, %v394
  %v599 = vcombine.low %v395, %v396
  %v600 = vcombine.low %v397, %v366
  %v602 = vunpack.c.l.s4 1966171168
  %v603 = vunpack.c.0.s8 %v602
  %v604 = vlaneseq
  %v605 = vshrl.u32 %v604, 7
  %v606 = vsub.s32 %v603, %v605
  %v607 = vrot.slane %v597, %v606
  %v609 = vunpack.c.l.s4 1966171168
  %v610 = vunpack.c.0.s8 %v609
  %v611 = vlaneseq
  %v612 = vshrl.u32 %v611, 7
  %v613 = vsub.s32 %v610, %v612
  %v614 = vrot.slane %v598, %v613
  %v616 = vunpack.c.l.s4 1966171168
  %v617 = vunpack.c.0.s8 %v616
  %v618 = vlaneseq
  %v619 = vshrl.u32 %v618, 7
  %v620 = vsub.s32 %v617, %v619
  %v621 = vrot.slane %v599, %v620
  %v623 = vunpack.c.l.s4 1966171168
  %v624 = vunpack.c.0.s8 %v623
  %v625 = vlaneseq
  %v626 = vshrl.u32 %v625, 7
  %v627 = vsub.s32 %v624, %v626
  %v628 = vrot.slane %v600, %v627
  %v629 = vcombine.low %v607, %v614
  %v630 = vcombine.high %v607, %v614
  %v631 = vcombine.low %v621, %v628
  %v632 = vcombine.high %v621, %v628
  %v634 = vunpack.c.l.s4 1966171168
  %v635 = vunpack.c.0.s8 %v634
  %v636 = vlaneseq
  %v637 = vshrl.u32 %v636, 7
  %v638 = vsub.s32 %v635, %v637
  %v639 = vrot.slane %v629, %v638
  %v641 = vunpack.c.l.s4 1966171168
  %v642 = vunpack.c.0.s8 %v641
  %v643 = vlaneseq
  %v644 = vshrl.u32 %v643, 7
  %v645 = vsub.s32 %v642, %v644
  %v646 = vrot.slane %v630, %v645
  %v648 = vunpack.c.l.s4 1966171168
  %v649 = vunpack.c.0.s8 %v648
  %v650 = vlaneseq
  %v651 = vshrl.u32 %v650, 7
  %v652 = vsub.s32 %v649, %v651
  %v653 = vrot.slane %v631, %v652
  %v655 = vunpack.c.l.s4 1966171168
  %v656 = vunpack.c.0.s8 %v655
  %v657 = vlaneseq
  %v658 = vshrl.u32 %v657, 7
  %v659 = vsub.s32 %v656, %v658
  %v660 = vrot.slane %v632, %v659
  %v661 = vcombine.low %v639, %v653
  %v662 = vcombine.low %v646, %v660
  %v691 = vunpack.c.l.b16 %v55
  %v692 = vunpack.c.h.b16 %v55
  %v693 = vunpack.c.l.b16 %v56
  %v694 = vunpack.c.h.b16 %v56
  %v695 = vunpack.c.l.b16 %v57
  %v696 = vunpack.c.h.b16 %v57
  %v697 = vunpack.c.l.b16 %v58
  %v698 = vunpack.c.h.b16 %v58
  %v699 = vunpack.c.l.b16 %v59
  %v700 = vunpack.c.h.b16 %v59
  %v701 = vunpack.c.l.b16 %v60
  %v702 = vunpack.c.h.b16 %v60
  %v703 = vunpack.c.l.b16 %v61
  %v704 = vunpack.c.h.b16 %v61
  %v705 = vunpack.c.l.b16 %v62
  %v706 = vunpack.c.h.b16 %v62
  %v707 = vunpack.c.l.b16 %v63
  %v708 = vunpack.c.h.b16 %v63
  %v709 = vunpack.c.l.b16 %v64
  %v710 = vunpack.c.h.b16 %v64
  %v711 = vunpack.c.l.b16 %v65
  %v712 = vunpack.c.h.b16 %v65
  %v713 = vunpack.c.l.b16 %v66
  %v714 = vunpack.c.h.b16 %v66
  %v715 = vunpack.c.l.b16 %v67
  %v716 = vunpack.c.h.b16 %v67
  %v717 = vunpack.c.l.b16 %v68
  %v718 = vunpack.c.h.b16 %v68
  %v719 = vunpack.c.l.b16 %v69
  %v720 = vunpack.c.h.b16 %v69
  %v721 = vunpack.c.l.b16 %v70
  %v722 = vunpack.c.h.b16 %v70
  %v723 = vunpack.c.l.b16 %v71
  %v724 = vunpack.c.h.b16 %v71
  %v725 = vunpack.c.l.b16 %v72
  %v726 = vunpack.c.h.b16 %v72
  %v727 = vunpack.c.l.b16 %v73
  %v728 = vunpack.c.h.b16 %v73
  %v729 = vunpack.c.l.b16 %v74
  %v730 = vunpack.c.h.b16 %v74
  %v731 = vunpack.c.l.b16 %v75
  %v732 = vunpack.c.h.b16 %v75
  %v733 = vunpack.c.l.b16 %v76
  %v734 = vunpack.c.h.b16 %v76
  %v735 = vunpack.c.l.b16 %v77
  %v736 = vunpack.c.h.b16 %v77
  %v737 = vunpack.c.l.b16 %v78
  %v738 = vunpack.c.h.b16 %v78
  %v739 = vpack.c.b16 %v693, %v691
  %v740 = vpack.c.b16 %v694, %v692
  %v741 = vpack.c.b16 %v697, %v695
  %v742 = vpack.c.b16 %v698, %v696
  %v743 = vpack.c.b16 %v701, %v699
  %v744 = vpack.c.b16 %v702, %v700
  %v745 = vpack.c.b16 %v705, %v703
  %v746 = vpack.c.b16 %v706, %v704
  %v747 = vpack.c.b16 %v709, %v707
  %v748 = vpack.c.b16 %v710, %v708
  %v749 = vpack.c.b16 %v713, %v711
  %v750 = vpack.c.b16 %v714, %v712
  %v751 = vpack.c.b16 %v717, %v715
  %v752 = vpack.c.b16 %v718, %v716
  %v753 = vpack.c.b16 %v721, %v719
  %v754 = vpack.c.b16 %v722, %v720
  %v755 = vpack.c.b16 %v725, %v723
  %v756 = vpack.c.b16 %v726, %v724
  %v757 = vpack.c.b16 %v729, %v727
  %v758 = vpack.c.b16 %v730, %v728
  %v759 = vpack.c.b16 %v733, %v731
  %v760 = vpack.c.b16 %v734, %v732
  %v761 = vpack.c.b16 %v737, %v735
  %v762 = vpack.c.b16 %v738, %v736
  %vm787 = vcmask 523264
  %v789 = vsel %vm787, %v464, 0
  %v792 = vsel %vm787, %v530, 0
  %v795 = vsel %vm787, %v596, 0
  %v798 = vsel %vm787, %v662, 0
  %800 = vmatprep.subr.bf16.mxu0 %v754
  %801 = vmatpush1.bf16.msra.mxu0 %v753
  %802 = vmatprep.subr.bf16.mxu0 %v752
  %803 = vmatpush1.bf16.msra.mxu0 %v751
  %804 = vmatprep.subr.bf16.mxu0 %v750
  %805 = vmatpush1.bf16.msra.mxu0 %v749
  %806 = vmatprep.subr.bf16.mxu0 %v748
  %807 = vmatpush1.bf16.msra.mxu0 %v747
  %808 = vmatprep.subr.bf16.mxu0 %v746
  %809 = vmatpush1.bf16.msra.mxu0 %v745
  %810 = vmatprep.subr.bf16.mxu0 %v744
  %811 = vmatpush1.bf16.msra.mxu0 %v743
  %812 = vmatprep.subr.bf16.mxu0 %v742
  %813 = vmatpush1.bf16.msra.mxu0 %v741
  %814 = vmatprep.subr.bf16.mxu0 %v740
  %815 = vmatpush1.bf16.msra.mxu0 %v739
  %816 = vmatprep.subr.bf16.mxu0 0
  %817 = vmatpush2.bf16.msra.mxu0 0
  %818 = vmatprep.subr.bf16.mxu0 0
  %819 = vmatpush2.bf16.msra.mxu0 0
  %820 = vmatprep.subr.bf16.mxu0 0
  %821 = vmatpush2.bf16.msra.mxu0 0
  %822 = vmatprep.subr.bf16.mxu0 0
  %823 = vmatpush2.bf16.msra.mxu0 0
  %824 = vmatprep.subr.bf16.mxu0 %v762
  %825 = vmatpush2.bf16.msra.mxu0 %v761
  %826 = vmatprep.subr.bf16.mxu0 %v760
  %827 = vmatpush2.bf16.msra.mxu0 %v759
  %828 = vmatprep.subr.bf16.mxu0 %v758
  %829 = vmatpush2.bf16.msra.mxu0 %v757
  %830 = vmatprep.subr.bf16.mxu0 %v756
  %831 = vmatpush2.bf16.msra.mxu0 %v755
  %832 = vmatprep.mubr.bf16.mxu0 %v789
  %833 = vmatmul.mubr.bf16.gmra.mxu0 %v463
  %v834 = vpop.f32.mrf.mxu0
  %v835 = vadd.f32 0.0, %v834
  %v836 = vpop.f32.mrf.mxu0
  %v837 = vadd.f32 0.0, %v836
  %v838 = vpop.f32.mrf.mxu0
  %v839 = vadd.f32 0.0, %v838
  %v840 = vpop.f32.mrf.mxu0
  %v841 = vadd.f32 0.0, %v840
  %842 = vmatprep.mubr.bf16.mxu0 %v792
  %843 = vmatmul.mubr.bf16.gmra.mxu0 %v529
  %v844 = vpop.f32.mrf.mxu0
  %v845 = vadd.f32 0.0, %v844
  %v846 = vpop.f32.mrf.mxu0
  %v847 = vadd.f32 0.0, %v846
  %v848 = vpop.f32.mrf.mxu0
  %v849 = vadd.f32 0.0, %v848
  %v850 = vpop.f32.mrf.mxu0
  %v851 = vadd.f32 0.0, %v850
  %852 = vmatprep.mubr.bf16.mxu0 %v795
  %853 = vmatmul.mubr.bf16.gmra.mxu0 %v595
  %v854 = vpop.f32.mrf.mxu0
  %v855 = vadd.f32 0.0, %v854
  %v856 = vpop.f32.mrf.mxu0
  %v857 = vadd.f32 0.0, %v856
  %v858 = vpop.f32.mrf.mxu0
  %v859 = vadd.f32 0.0, %v858
  %v860 = vpop.f32.mrf.mxu0
  %v861 = vadd.f32 0.0, %v860
  %862 = vmatprep.mubr.bf16.mxu0 %v798
  %863 = vmatmul.mubr.bf16.gmra.mxu0 %v661
  %v864 = vpop.f32.mrf.mxu0
  %v865 = vadd.f32 0.0, %v864
  %v866 = vpop.f32.mrf.mxu0
  %v867 = vadd.f32 0.0, %v866
  %v868 = vpop.f32.mrf.mxu0
  %v869 = vadd.f32 0.0, %v868
  %v870 = vpop.f32.mrf.mxu0
  %v871 = vadd.f32 0.0, %v870
  %872 = vdwg.mxu0
  %v873 = vunpack.i.l.s16 %v102
  %v874 = vunpack.i.l.s16 %v126
  %v875 = vunpack.i.l.s16 %v150
  %v876 = vunpack.i.l.s16 %v174
  %v877 = vunpack.i.l.s16 %v198
  %v878 = vunpack.i.l.s16 %v222
  %v879 = vunpack.i.l.s16 %v246
  %v880 = vunpack.i.l.s16 %v270
  %v881 = vunpack.i.l.s16 %v294
  %v882 = vpack.i.b16 %v304, %v873
  %v883 = vpack.i.b16 %v306, %v305
  %v884 = vpack.i.b16 %v308, %v307
  %v885 = vpack.i.b16 %v874, %v309
  %v886 = vpack.i.b16 %v312, %v311
  %v887 = vpack.i.b16 %v314, %v313
  %v888 = vpack.i.b16 %v316, %v315
  %v889 = vpack.i.b16 %v318, %v875
  %v890 = vpack.i.b16 %v320, %v319
  %v891 = vpack.i.b16 %v322, %v321
  %v892 = vpack.i.b16 %v876, %v323
  %v893 = vpack.i.b16 %v326, %v325
  %v894 = vpack.i.b16 %v328, %v327
  %v895 = vpack.i.b16 %v330, %v329
  %v896 = vpack.i.b16 %v332, %v877
  %v897 = vpack.i.b16 %v334, %v333
  %v898 = vpack.i.b16 %v336, %v335
  %v899 = vpack.i.b16 %v878, %v337
  %v900 = vpack.i.b16 %v340, %v339
  %v901 = vpack.i.b16 %v342, %v341
  %v902 = vpack.i.b16 %v344, %v343
  %v903 = vpack.i.b16 %v346, %v879
  %v904 = vpack.i.b16 %v348, %v347
  %v905 = vpack.i.b16 %v350, %v349
  %v906 = vpack.i.b16 %v880, %v351
  %v907 = vpack.i.b16 %v354, %v353
  %v908 = vpack.i.b16 %v356, %v355
  %v909 = vpack.i.b16 %v358, %v357
  %v910 = vpack.i.b16 %v360, %v881
  %v911 = vpack.i.b16 %v362, %v361
  %v912 = vpack.i.b16 %v364, %v363
  %v914 = vcombine.low %v882, %v883
  %v915 = vcombine.low %v884, %v885
  %v916 = vcombine.low %v886, %v887
  %v917 = vcombine.low %v888, %v889
  %v919 = vunpack.c.l.s4 1966171168
  %v920 = vunpack.c.0.s8 %v919
  %v921 = vlaneseq
  %v922 = vshrl.u32 %v921, 7
  %v923 = vsub.s32 %v920, %v922
  %v924 = vrot.slane %v914, %v923
  %v926 = vunpack.c.l.s4 1966171168
  %v927 = vunpack.c.0.s8 %v926
  %v928 = vlaneseq
  %v929 = vshrl.u32 %v928, 7
  %v930 = vsub.s32 %v927, %v929
  %v931 = vrot.slane %v915, %v930
  %v933 = vunpack.c.l.s4 1966171168
  %v934 = vunpack.c.0.s8 %v933
  %v935 = vlaneseq
  %v936 = vshrl.u32 %v935, 7
  %v937 = vsub.s32 %v934, %v936
  %v938 = vrot.slane %v916, %v937
  %v940 = vunpack.c.l.s4 1966171168
  %v941 = vunpack.c.0.s8 %v940
  %v942 = vlaneseq
  %v943 = vshrl.u32 %v942, 7
  %v944 = vsub.s32 %v941, %v943
  %v945 = vrot.slane %v917, %v944
  %v946 = vcombine.low %v924, %v931
  %v947 = vcombine.high %v924, %v931
  %v948 = vcombine.low %v938, %v945
  %v949 = vcombine.high %v938, %v945
  %v951 = vunpack.c.l.s4 1966171168
  %v952 = vunpack.c.0.s8 %v951
  %v953 = vlaneseq
  %v954 = vshrl.u32 %v953, 7
  %v955 = vsub.s32 %v952, %v954
  %v956 = vrot.slane %v946, %v955
  %v958 = vunpack.c.l.s4 1966171168
  %v959 = vunpack.c.0.s8 %v958
  %v960 = vlaneseq
  %v961 = vshrl.u32 %v960, 7
  %v962 = vsub.s32 %v959, %v961
  %v963 = vrot.slane %v947, %v962
  %v965 = vunpack.c.l.s4 1966171168
  %v966 = vunpack.c.0.s8 %v965
  %v967 = vlaneseq
  %v968 = vshrl.u32 %v967, 7
  %v969 = vsub.s32 %v966, %v968
  %v970 = vrot.slane %v948, %v969
  %v972 = vunpack.c.l.s4 1966171168
  %v973 = vunpack.c.0.s8 %v972
  %v974 = vlaneseq
  %v975 = vshrl.u32 %v974, 7
  %v976 = vsub.s32 %v973, %v975
  %v977 = vrot.slane %v949, %v976
  %v978 = vcombine.low %v956, %v970
  %v979 = vcombine.low %v963, %v977
  %v980 = vcombine.low %v890, %v891
  %v981 = vcombine.low %v892, %v893
  %v982 = vcombine.low %v894, %v895
  %v983 = vcombine.low %v896, %v897
  %v985 = vunpack.c.l.s4 1966171168
  %v986 = vunpack.c.0.s8 %v985
  %v987 = vlaneseq
  %v988 = vshrl.u32 %v987, 7
  %v989 = vsub.s32 %v986, %v988
  %v990 = vrot.slane %v980, %v989
  %v992 = vunpack.c.l.s4 1966171168
  %v993 = vunpack.c.0.s8 %v992
  %v994 = vlaneseq
  %v995 = vshrl.u32 %v994, 7
  %v996 = vsub.s32 %v993, %v995
  %v997 = vrot.slane %v981, %v996
  %v999 = vunpack.c.l.s4 1966171168
  %v1000 = vunpack.c.0.s8 %v999
  %v1001 = vlaneseq
  %v1002 = vshrl.u32 %v1001, 7
  %v1003 = vsub.s32 %v1000, %v1002
  %v1004 = vrot.slane %v982, %v1003
  %v1006 = vunpack.c.l.s4 1966171168
  %v1007 = vunpack.c.0.s8 %v1006
  %v1008 = vlaneseq
  %v1009 = vshrl.u32 %v1008, 7
  %v1010 = vsub.s32 %v1007, %v1009
  %v1011 = vrot.slane %v983, %v1010
  %v1012 = vcombine.low %v990, %v997
  %v1013 = vcombine.high %v990, %v997
  %v1014 = vcombine.low %v1004, %v1011
  %v1015 = vcombine.high %v1004, %v1011
  %v1017 = vunpack.c.l.s4 1966171168
  %v1018 = vunpack.c.0.s8 %v1017
  %v1019 = vlaneseq
  %v1020 = vshrl.u32 %v1019, 7
  %v1021 = vsub.s32 %v1018, %v1020
  %v1022 = vrot.slane %v1012, %v1021
  %v1024 = vunpack.c.l.s4 1966171168
  %v1025 = vunpack.c.0.s8 %v1024
  %v1026 = vlaneseq
  %v1027 = vshrl.u32 %v1026, 7
  %v1028 = vsub.s32 %v1025, %v1027
  %v1029 = vrot.slane %v1013, %v1028
  %v1031 = vunpack.c.l.s4 1966171168
  %v1032 = vunpack.c.0.s8 %v1031
  %v1033 = vlaneseq
  %v1034 = vshrl.u32 %v1033, 7
  %v1035 = vsub.s32 %v1032, %v1034
  %v1036 = vrot.slane %v1014, %v1035
  %v1038 = vunpack.c.l.s4 1966171168
  %v1039 = vunpack.c.0.s8 %v1038
  %v1040 = vlaneseq
  %v1041 = vshrl.u32 %v1040, 7
  %v1042 = vsub.s32 %v1039, %v1041
  %v1043 = vrot.slane %v1015, %v1042
  %v1044 = vcombine.low %v1022, %v1036
  %v1045 = vcombine.low %v1029, %v1043
  %v1046 = vcombine.low %v898, %v899
  %v1047 = vcombine.low %v900, %v901
  %v1048 = vcombine.low %v902, %v903
  %v1049 = vcombine.low %v904, %v905
  %v1051 = vunpack.c.l.s4 1966171168
  %v1052 = vunpack.c.0.s8 %v1051
  %v1053 = vlaneseq
  %v1054 = vshrl.u32 %v1053, 7
  %v1055 = vsub.s32 %v1052, %v1054
  %v1056 = vrot.slane %v1046, %v1055
  %v1058 = vunpack.c.l.s4 1966171168
  %v1059 = vunpack.c.0.s8 %v1058
  %v1060 = vlaneseq
  %v1061 = vshrl.u32 %v1060, 7
  %v1062 = vsub.s32 %v1059, %v1061
  %v1063 = vrot.slane %v1047, %v1062
  %v1065 = vunpack.c.l.s4 1966171168
  %v1066 = vunpack.c.0.s8 %v1065
  %v1067 = vlaneseq
  %v1068 = vshrl.u32 %v1067, 7
  %v1069 = vsub.s32 %v1066, %v1068
  %v1070 = vrot.slane %v1048, %v1069
  %v1072 = vunpack.c.l.s4 1966171168
  %v1073 = vunpack.c.0.s8 %v1072
  %v1074 = vlaneseq
  %v1075 = vshrl.u32 %v1074, 7
  %v1076 = vsub.s32 %v1073, %v1075
  %v1077 = vrot.slane %v1049, %v1076
  %v1078 = vcombine.low %v1056, %v1063
  %v1079 = vcombine.high %v1056, %v1063
  %v1080 = vcombine.low %v1070, %v1077
  %v1081 = vcombine.high %v1070, %v1077
  %v1083 = vunpack.c.l.s4 1966171168
  %v1084 = vunpack.c.0.s8 %v1083
  %v1085 = vlaneseq
  %v1086 = vshrl.u32 %v1085, 7
  %v1087 = vsub.s32 %v1084, %v1086
  %v1088 = vrot.slane %v1078, %v1087
  %v1090 = vunpack.c.l.s4 1966171168
  %v1091 = vunpack.c.0.s8 %v1090
  %v1092 = vlaneseq
  %v1093 = vshrl.u32 %v1092, 7
  %v1094 = vsub.s32 %v1091, %v1093
  %v1095 = vrot.slane %v1079, %v1094
  %v1097 = vunpack.c.l.s4 1966171168
  %v1098 = vunpack.c.0.s8 %v1097
  %v1099 = vlaneseq
  %v1100 = vshrl.u32 %v1099, 7
  %v1101 = vsub.s32 %v1098, %v1100
  %v1102 = vrot.slane %v1080, %v1101
  %v1104 = vunpack.c.l.s4 1966171168
  %v1105 = vunpack.c.0.s8 %v1104
  %v1106 = vlaneseq
  %v1107 = vshrl.u32 %v1106, 7
  %v1108 = vsub.s32 %v1105, %v1107
  %v1109 = vrot.slane %v1081, %v1108
  %v1110 = vcombine.low %v1088, %v1102
  %v1111 = vcombine.low %v1095, %v1109
  %v1112 = vcombine.low %v906, %v907
  %v1113 = vcombine.low %v908, %v909
  %v1114 = vcombine.low %v910, %v911
  %v1115 = vcombine.low %v912, %v365
  %v1117 = vunpack.c.l.s4 1966171168
  %v1118 = vunpack.c.0.s8 %v1117
  %v1119 = vlaneseq
  %v1120 = vshrl.u32 %v1119, 7
  %v1121 = vsub.s32 %v1118, %v1120
  %v1122 = vrot.slane %v1112, %v1121
  %v1124 = vunpack.c.l.s4 1966171168
  %v1125 = vunpack.c.0.s8 %v1124
  %v1126 = vlaneseq
  %v1127 = vshrl.u32 %v1126, 7
  %v1128 = vsub.s32 %v1125, %v1127
  %v1129 = vrot.slane %v1113, %v1128
  %v1131 = vunpack.c.l.s4 1966171168
  %v1132 = vunpack.c.0.s8 %v1131
  %v1133 = vlaneseq
  %v1134 = vshrl.u32 %v1133, 7
  %v1135 = vsub.s32 %v1132, %v1134
  %v1136 = vrot.slane %v1114, %v1135
  %v1138 = vunpack.c.l.s4 1966171168
  %v1139 = vunpack.c.0.s8 %v1138
  %v1140 = vlaneseq
  %v1141 = vshrl.u32 %v1140, 7
  %v1142 = vsub.s32 %v1139, %v1141
  %v1143 = vrot.slane %v1115, %v1142
  %v1144 = vcombine.low %v1122, %v1129
  %v1145 = vcombine.high %v1122, %v1129
  %v1146 = vcombine.low %v1136, %v1143
  %v1147 = vcombine.high %v1136, %v1143
  %v1149 = vunpack.c.l.s4 1966171168
  %v1150 = vunpack.c.0.s8 %v1149
  %v1151 = vlaneseq
  %v1152 = vshrl.u32 %v1151, 7
  %v1153 = vsub.s32 %v1150, %v1152
  %v1154 = vrot.slane %v1144, %v1153
  %v1156 = vunpack.c.l.s4 1966171168
  %v1157 = vunpack.c.0.s8 %v1156
  %v1158 = vlaneseq
  %v1159 = vshrl.u32 %v1158, 7
  %v1160 = vsub.s32 %v1157, %v1159
  %v1161 = vrot.slane %v1145, %v1160
  %v1163 = vunpack.c.l.s4 1966171168
  %v1164 = vunpack.c.0.s8 %v1163
  %v1165 = vlaneseq
  %v1166 = vshrl.u32 %v1165, 7
  %v1167 = vsub.s32 %v1164, %v1166
  %v1168 = vrot.slane %v1146, %v1167
  %v1170 = vunpack.c.l.s4 1966171168
  %v1171 = vunpack.c.0.s8 %v1170
  %v1172 = vlaneseq
  %v1173 = vshrl.u32 %v1172, 7
  %v1174 = vsub.s32 %v1171, %v1173
  %v1175 = vrot.slane %v1147, %v1174
  %v1176 = vcombine.low %v1154, %v1168
  %v1177 = vcombine.low %v1161, %v1175
  %v1206 = vunpack.c.l.b16 %v30
  %v1207 = vunpack.c.h.b16 %v30
  %v1208 = vunpack.c.l.b16 %v31
  %v1209 = vunpack.c.h.b16 %v31
  %v1210 = vunpack.c.l.b16 %v32
  %v1211 = vunpack.c.h.b16 %v32
  %v1212 = vunpack.c.l.b16 %v33
  %v1213 = vunpack.c.h.b16 %v33
  %v1214 = vunpack.c.l.b16 %v34
  %v1215 = vunpack.c.h.b16 %v34
  %v1216 = vunpack.c.l.b16 %v35
  %v1217 = vunpack.c.h.b16 %v35
  %v1218 = vunpack.c.l.b16 %v36
  %v1219 = vunpack.c.h.b16 %v36
  %v1220 = vunpack.c.l.b16 %v37
  %v1221 = vunpack.c.h.b16 %v37
  %v1222 = vunpack.c.l.b16 %v38
  %v1223 = vunpack.c.h.b16 %v38
  %v1224 = vunpack.c.l.b16 %v39
  %v1225 = vunpack.c.h.b16 %v39
  %v1226 = vunpack.c.l.b16 %v40
  %v1227 = vunpack.c.h.b16 %v40
  %v1228 = vunpack.c.l.b16 %v41
  %v1229 = vunpack.c.h.b16 %v41
  %v1230 = vunpack.c.l.b16 %v42
  %v1231 = vunpack.c.h.b16 %v42
  %v1232 = vunpack.c.l.b16 %v43
  %v1233 = vunpack.c.h.b16 %v43
  %v1234 = vunpack.c.l.b16 %v44
  %v1235 = vunpack.c.h.b16 %v44
  %v1236 = vunpack.c.l.b16 %v45
  %v1237 = vunpack.c.h.b16 %v45
  %v1238 = vunpack.c.l.b16 %v46
  %v1239 = vunpack.c.h.b16 %v46
  %v1240 = vunpack.c.l.b16 %v47
  %v1241 = vunpack.c.h.b16 %v47
  %v1242 = vunpack.c.l.b16 %v48
  %v1243 = vunpack.c.h.b16 %v48
  %v1244 = vunpack.c.l.b16 %v49
  %v1245 = vunpack.c.h.b16 %v49
  %v1246 = vunpack.c.l.b16 %v50
  %v1247 = vunpack.c.h.b16 %v50
  %v1248 = vunpack.c.l.b16 %v51
  %v1249 = vunpack.c.h.b16 %v51
  %v1250 = vunpack.c.l.b16 %v52
  %v1251 = vunpack.c.h.b16 %v52
  %v1252 = vunpack.c.l.b16 %v53
  %v1253 = vunpack.c.h.b16 %v53
  %v1254 = vpack.c.b16 %v1208, %v1206
  %v1255 = vpack.c.b16 %v1209, %v1207
  %v1256 = vpack.c.b16 %v1212, %v1210
  %v1257 = vpack.c.b16 %v1213, %v1211
  %v1258 = vpack.c.b16 %v1216, %v1214
  %v1259 = vpack.c.b16 %v1217, %v1215
  %v1260 = vpack.c.b16 %v1220, %v1218
  %v1261 = vpack.c.b16 %v1221, %v1219
  %v1262 = vpack.c.b16 %v1224, %v1222
  %v1263 = vpack.c.b16 %v1225, %v1223
  %v1264 = vpack.c.b16 %v1228, %v1226
  %v1265 = vpack.c.b16 %v1229, %v1227
  %v1266 = vpack.c.b16 %v1232, %v1230
  %v1267 = vpack.c.b16 %v1233, %v1231
  %v1268 = vpack.c.b16 %v1236, %v1234
  %v1269 = vpack.c.b16 %v1237, %v1235
  %v1270 = vpack.c.b16 %v1240, %v1238
  %v1271 = vpack.c.b16 %v1241, %v1239
  %v1272 = vpack.c.b16 %v1244, %v1242
  %v1273 = vpack.c.b16 %v1245, %v1243
  %v1274 = vpack.c.b16 %v1248, %v1246
  %v1275 = vpack.c.b16 %v1249, %v1247
  %v1276 = vpack.c.b16 %v1252, %v1250
  %v1277 = vpack.c.b16 %v1253, %v1251
  %v1303 = vsel %vm787, %v979, 0
  %v1306 = vsel %vm787, %v1045, 0
  %v1309 = vsel %vm787, %v1111, 0
  %v1312 = vsel %vm787, %v1177, 0
  %1314 = vmatprep.subr.bf16.mxu0 %v1269
  %1315 = vmatpush1.bf16.msra.mxu0 %v1268
  %1316 = vmatprep.subr.bf16.mxu0 %v1267
  %1317 = vmatpush1.bf16.msra.mxu0 %v1266
  %1318 = vmatprep.subr.bf16.mxu0 %v1265
  %1319 = vmatpush1.bf16.msra.mxu0 %v1264
  %1320 = vmatprep.subr.bf16.mxu0 %v1263
  %1321 = vmatpush1.bf16.msra.mxu0 %v1262
  %1322 = vmatprep.subr.bf16.mxu0 %v1261
  %1323 = vmatpush1.bf16.msra.mxu0 %v1260
  %1324 = vmatprep.subr.bf16.mxu0 %v1259
  %1325 = vmatpush1.bf16.msra.mxu0 %v1258
  %1326 = vmatprep.subr.bf16.mxu0 %v1257
  %1327 = vmatpush1.bf16.msra.mxu0 %v1256
  %1328 = vmatprep.subr.bf16.mxu0 %v1255
  %1329 = vmatpush1.bf16.msra.mxu0 %v1254
  %1330 = vmatprep.subr.bf16.mxu0 0
  %1331 = vmatpush2.bf16.msra.mxu0 0
  %1332 = vmatprep.subr.bf16.mxu0 0
  %1333 = vmatpush2.bf16.msra.mxu0 0
  %1334 = vmatprep.subr.bf16.mxu0 0
  %1335 = vmatpush2.bf16.msra.mxu0 0
  %1336 = vmatprep.subr.bf16.mxu0 0
  %1337 = vmatpush2.bf16.msra.mxu0 0
  %1338 = vmatprep.subr.bf16.mxu0 %v1277
  %1339 = vmatpush2.bf16.msra.mxu0 %v1276
  %1340 = vmatprep.subr.bf16.mxu0 %v1275
  %1341 = vmatpush2.bf16.msra.mxu0 %v1274
  %1342 = vmatprep.subr.bf16.mxu0 %v1273
  %1343 = vmatpush2.bf16.msra.mxu0 %v1272
  %1344 = vmatprep.subr.bf16.mxu0 %v1271
  %1345 = vmatpush2.bf16.msra.mxu0 %v1270
  %1346 = vmatprep.mubr.bf16.mxu0 %v1303
  %1347 = vmatmul.mubr.bf16.gmra.mxu0 %v978
  %v1348 = vpop.f32.mrf.mxu0
  %v1349 = vadd.f32 %v835, %v1348
  %v1350 = vpop.f32.mrf.mxu0
  %v1351 = vadd.f32 %v837, %v1350
  %v1352 = vpop.f32.mrf.mxu0
  %v1353 = vadd.f32 %v839, %v1352
  %v1354 = vpop.f32.mrf.mxu0
  %v1355 = vadd.f32 %v841, %v1354
  %1356 = vmatprep.mubr.bf16.mxu0 %v1306
  %1357 = vmatmul.mubr.bf16.gmra.mxu0 %v1044
  %v1358 = vpop.f32.mrf.mxu0
  %v1359 = vadd.f32 %v845, %v1358
  %v1360 = vpop.f32.mrf.mxu0
  %v1361 = vadd.f32 %v847, %v1360
  %v1362 = vpop.f32.mrf.mxu0
  %v1363 = vadd.f32 %v849, %v1362
  %v1364 = vpop.f32.mrf.mxu0
  %v1365 = vadd.f32 %v851, %v1364
  %1366 = vmatprep.mubr.bf16.mxu0 %v1309
  %1367 = vmatmul.mubr.bf16.gmra.mxu0 %v1110
  %v1368 = vpop.f32.mrf.mxu0
  %v1369 = vadd.f32 %v855, %v1368
  %v1370 = vpop.f32.mrf.mxu0
  %v1371 = vadd.f32 %v857, %v1370
  %v1372 = vpop.f32.mrf.mxu0
  %v1373 = vadd.f32 %v859, %v1372
  %v1374 = vpop.f32.mrf.mxu0
  %v1375 = vadd.f32 %v861, %v1374
  %1376 = vmatprep.mubr.bf16.mxu0 %v1312
  %1377 = vmatmul.mubr.bf16.gmra.mxu0 %v1176
  %v1378 = vpop.f32.mrf.mxu0
  %v1379 = vadd.f32 %v865, %v1378
  %v1380 = vpop.f32.mrf.mxu0
  %v1381 = vadd.f32 %v867, %v1380
  %v1382 = vpop.f32.mrf.mxu0
  %v1383 = vadd.f32 %v869, %v1382
  %v1384 = vpop.f32.mrf.mxu0
  %v1385 = vadd.f32 %v871, %v1384
  %1386 = vdwg.mxu0
  %v1403 = vcombine.low %v1349, %v1351
  %v1404 = vcombine.high %v1349, %v1351
  %v1406 = vunpack.c.l.s4 1966171168
  %v1407 = vunpack.c.0.s8 %v1406
  %v1408 = vlaneseq
  %v1409 = vshrl.u32 %v1408, 7
  %v1410 = vsub.s32 %v1407, %v1409
  %v1411 = vrot.slane %v1403, %v1410
  %v1413 = vunpack.c.l.s4 1966171168
  %v1414 = vunpack.c.0.s8 %v1413
  %v1415 = vlaneseq
  %v1416 = vshrl.u32 %v1415, 7
  %v1417 = vsub.s32 %v1414, %v1416
  %v1418 = vrot.slane %v1404, %v1417
  %v1419 = vcombine.high %v1411, %v1411
  %v1420 = vcombine.high %v1418, %v1418
  %v1422 = vunpack.c.l.s4 1966171168
  %v1423 = vunpack.c.0.s8 %v1422
  %v1424 = vlaneseq
  %v1425 = vshrl.u32 %v1424, 7
  %v1426 = vsub.s32 %v1423, %v1425
  %v1427 = vrot.slane %v1411, %v1426
  %v1429 = vunpack.c.l.s4 1966171168
  %v1430 = vunpack.c.0.s8 %v1429
  %v1431 = vlaneseq
  %v1432 = vshrl.u32 %v1431, 7
  %v1433 = vsub.s32 %v1430, %v1432
  %v1434 = vrot.slane %v1418, %v1433
  %v1436 = vunpack.c.l.s4 1966171168
  %v1437 = vunpack.c.0.s8 %v1436
  %v1438 = vlaneseq
  %v1439 = vshrl.u32 %v1438, 7
  %v1440 = vsub.s32 %v1437, %v1439
  %v1441 = vrot.slane %v1419, %v1440
  %v1443 = vunpack.c.l.s4 1966171168
  %v1444 = vunpack.c.0.s8 %v1443
  %v1445 = vlaneseq
  %v1446 = vshrl.u32 %v1445, 7
  %v1447 = vsub.s32 %v1444, %v1446
  %v1448 = vrot.slane %v1420, %v1447
  %v1449 = vcombine.high %v1427, %v1427
  %v1450 = vcombine.high %v1434, %v1434
  %v1451 = vcombine.high %v1441, %v1441
  %v1452 = vcombine.high %v1448, %v1448
  %v1453 = vcombine.low %v1353, %v1355
  %v1454 = vcombine.high %v1353, %v1355
  %v1456 = vunpack.c.l.s4 1966171168
  %v1457 = vunpack.c.0.s8 %v1456
  %v1458 = vlaneseq
  %v1459 = vshrl.u32 %v1458, 7
  %v1460 = vsub.s32 %v1457, %v1459
  %v1461 = vrot.slane %v1453, %v1460
  %v1463 = vunpack.c.l.s4 1966171168
  %v1464 = vunpack.c.0.s8 %v1463
  %v1465 = vlaneseq
  %v1466 = vshrl.u32 %v1465, 7
  %v1467 = vsub.s32 %v1464, %v1466
  %v1468 = vrot.slane %v1454, %v1467
  %v1469 = vcombine.high %v1461, %v1461
  %v1470 = vcombine.high %v1468, %v1468
  %v1472 = vunpack.c.l.s4 1966171168
  %v1473 = vunpack.c.0.s8 %v1472
  %v1474 = vlaneseq
  %v1475 = vshrl.u32 %v1474, 7
  %v1476 = vsub.s32 %v1473, %v1475
  %v1477 = vrot.slane %v1461, %v1476
  %v1479 = vunpack.c.l.s4 1966171168
  %v1480 = vunpack.c.0.s8 %v1479
  %v1481 = vlaneseq
  %v1482 = vshrl.u32 %v1481, 7
  %v1483 = vsub.s32 %v1480, %v1482
  %v1484 = vrot.slane %v1468, %v1483
  %v1486 = vunpack.c.l.s4 1966171168
  %v1487 = vunpack.c.0.s8 %v1486
  %v1488 = vlaneseq
  %v1489 = vshrl.u32 %v1488, 7
  %v1490 = vsub.s32 %v1487, %v1489
  %v1491 = vrot.slane %v1469, %v1490
  %v1493 = vunpack.c.l.s4 1966171168
  %v1494 = vunpack.c.0.s8 %v1493
  %v1495 = vlaneseq
  %v1496 = vshrl.u32 %v1495, 7
  %v1497 = vsub.s32 %v1494, %v1496
  %v1498 = vrot.slane %v1470, %v1497
  %v1499 = vcombine.high %v1477, %v1477
  %v1500 = vcombine.high %v1484, %v1484
  %v1501 = vcombine.high %v1491, %v1491
  %v1502 = vcombine.high %v1498, %v1498
  %v1503 = vcombine.low %v1359, %v1361
  %v1504 = vcombine.high %v1359, %v1361
  %v1506 = vunpack.c.l.s4 1966171168
  %v1507 = vunpack.c.0.s8 %v1506
  %v1508 = vlaneseq
  %v1509 = vshrl.u32 %v1508, 7
  %v1510 = vsub.s32 %v1507, %v1509
  %v1511 = vrot.slane %v1503, %v1510
  %v1513 = vunpack.c.l.s4 1966171168
  %v1514 = vunpack.c.0.s8 %v1513
  %v1515 = vlaneseq
  %v1516 = vshrl.u32 %v1515, 7
  %v1517 = vsub.s32 %v1514, %v1516
  %v1518 = vrot.slane %v1504, %v1517
  %v1519 = vcombine.high %v1511, %v1511
  %v1520 = vcombine.high %v1518, %v1518
  %v1522 = vunpack.c.l.s4 1966171168
  %v1523 = vunpack.c.0.s8 %v1522
  %v1524 = vlaneseq
  %v1525 = vshrl.u32 %v1524, 7
  %v1526 = vsub.s32 %v1523, %v1525
  %v1527 = vrot.slane %v1511, %v1526
  %v1529 = vunpack.c.l.s4 1966171168
  %v1530 = vunpack.c.0.s8 %v1529
  %v1531 = vlaneseq
  %v1532 = vshrl.u32 %v1531, 7
  %v1533 = vsub.s32 %v1530, %v1532
  %v1534 = vrot.slane %v1518, %v1533
  %v1536 = vunpack.c.l.s4 1966171168
  %v1537 = vunpack.c.0.s8 %v1536
  %v1538 = vlaneseq
  %v1539 = vshrl.u32 %v1538, 7
  %v1540 = vsub.s32 %v1537, %v1539
  %v1541 = vrot.slane %v1519, %v1540
  %v1543 = vunpack.c.l.s4 1966171168
  %v1544 = vunpack.c.0.s8 %v1543
  %v1545 = vlaneseq
  %v1546 = vshrl.u32 %v1545, 7
  %v1547 = vsub.s32 %v1544, %v1546
  %v1548 = vrot.slane %v1520, %v1547
  %v1549 = vcombine.high %v1527, %v1527
  %v1550 = vcombine.high %v1534, %v1534
  %v1551 = vcombine.high %v1541, %v1541
  %v1552 = vcombine.high %v1548, %v1548
  %v1553 = vcombine.low %v1363, %v1365
  %v1554 = vcombine.high %v1363, %v1365
  %v1556 = vunpack.c.l.s4 1966171168
  %v1557 = vunpack.c.0.s8 %v1556
  %v1558 = vlaneseq
  %v1559 = vshrl.u32 %v1558, 7
  %v1560 = vsub.s32 %v1557, %v1559
  %v1561 = vrot.slane %v1553, %v1560
  %v1563 = vunpack.c.l.s4 1966171168
  %v1564 = vunpack.c.0.s8 %v1563
  %v1565 = vlaneseq
  %v1566 = vshrl.u32 %v1565, 7
  %v1567 = vsub.s32 %v1564, %v1566
  %v1568 = vrot.slane %v1554, %v1567
  %v1569 = vcombine.high %v1561, %v1561
  %v1570 = vcombine.high %v1568, %v1568
  %v1572 = vunpack.c.l.s4 1966171168
  %v1573 = vunpack.c.0.s8 %v1572
  %v1574 = vlaneseq
  %v1575 = vshrl.u32 %v1574, 7
  %v1576 = vsub.s32 %v1573, %v1575
  %v1577 = vrot.slane %v1561, %v1576
  %v1579 = vunpack.c.l.s4 1966171168
  %v1580 = vunpack.c.0.s8 %v1579
  %v1581 = vlaneseq
  %v1582 = vshrl.u32 %v1581, 7
  %v1583 = vsub.s32 %v1580, %v1582
  %v1584 = vrot.slane %v1568, %v1583
  %v1586 = vunpack.c.l.s4 1966171168
  %v1587 = vunpack.c.0.s8 %v1586
  %v1588 = vlaneseq
  %v1589 = vshrl.u32 %v1588, 7
  %v1590 = vsub.s32 %v1587, %v1589
  %v1591 = vrot.slane %v1569, %v1590
  %v1593 = vunpack.c.l.s4 1966171168
  %v1594 = vunpack.c.0.s8 %v1593
  %v1595 = vlaneseq
  %v1596 = vshrl.u32 %v1595, 7
  %v1597 = vsub.s32 %v1594, %v1596
  %v1598 = vrot.slane %v1570, %v1597
  %v1599 = vcombine.high %v1577, %v1577
  %v1600 = vcombine.high %v1584, %v1584
  %v1601 = vcombine.high %v1591, %v1591
  %v1602 = vcombine.high %v1598, %v1598
  %v1603 = vcombine.low %v1369, %v1371
  %v1604 = vcombine.high %v1369, %v1371
  %v1606 = vunpack.c.l.s4 1966171168
  %v1607 = vunpack.c.0.s8 %v1606
  %v1608 = vlaneseq
  %v1609 = vshrl.u32 %v1608, 7
  %v1610 = vsub.s32 %v1607, %v1609
  %v1611 = vrot.slane %v1603, %v1610
  %v1613 = vunpack.c.l.s4 1966171168
  %v1614 = vunpack.c.0.s8 %v1613
  %v1615 = vlaneseq
  %v1616 = vshrl.u32 %v1615, 7
  %v1617 = vsub.s32 %v1614, %v1616
  %v1618 = vrot.slane %v1604, %v1617
  %v1619 = vcombine.high %v1611, %v1611
  %v1620 = vcombine.high %v1618, %v1618
  %v1622 = vunpack.c.l.s4 1966171168
  %v1623 = vunpack.c.0.s8 %v1622
  %v1624 = vlaneseq
  %v1625 = vshrl.u32 %v1624, 7
  %v1626 = vsub.s32 %v1623, %v1625
  %v1627 = vrot.slane %v1611, %v1626
  %v1629 = vunpack.c.l.s4 1966171168
  %v1630 = vunpack.c.0.s8 %v1629
  %v1631 = vlaneseq
  %v1632 = vshrl.u32 %v1631, 7
  %v1633 = vsub.s32 %v1630, %v1632
  %v1634 = vrot.slane %v1618, %v1633
  %v1636 = vunpack.c.l.s4 1966171168
  %v1637 = vunpack.c.0.s8 %v1636
  %v1638 = vlaneseq
  %v1639 = vshrl.u32 %v1638, 7
  %v1640 = vsub.s32 %v1637, %v1639
  %v1641 = vrot.slane %v1619, %v1640
  %v1643 = vunpack.c.l.s4 1966171168
  %v1644 = vunpack.c.0.s8 %v1643
  %v1645 = vlaneseq
  %v1646 = vshrl.u32 %v1645, 7
  %v1647 = vsub.s32 %v1644, %v1646
  %v1648 = vrot.slane %v1620, %v1647
  %v1649 = vcombine.high %v1627, %v1627
  %v1650 = vcombine.high %v1634, %v1634
  %v1651 = vcombine.high %v1641, %v1641
  %v1652 = vcombine.high %v1648, %v1648
  %v1653 = vcombine.low %v1373, %v1375
  %v1654 = vcombine.high %v1373, %v1375
  %v1656 = vunpack.c.l.s4 1966171168
  %v1657 = vunpack.c.0.s8 %v1656
  %v1658 = vlaneseq
  %v1659 = vshrl.u32 %v1658, 7
  %v1660 = vsub.s32 %v1657, %v1659
  %v1661 = vrot.slane %v1653, %v1660
  %v1663 = vunpack.c.l.s4 1966171168
  %v1664 = vunpack.c.0.s8 %v1663
  %v1665 = vlaneseq
  %v1666 = vshrl.u32 %v1665, 7
  %v1667 = vsub.s32 %v1664, %v1666
  %v1668 = vrot.slane %v1654, %v1667
  %v1669 = vcombine.high %v1661, %v1661
  %v1670 = vcombine.high %v1668, %v1668
  %v1672 = vunpack.c.l.s4 1966171168
  %v1673 = vunpack.c.0.s8 %v1672
  %v1674 = vlaneseq
  %v1675 = vshrl.u32 %v1674, 7
  %v1676 = vsub.s32 %v1673, %v1675
  %v1677 = vrot.slane %v1661, %v1676
  %v1679 = vunpack.c.l.s4 1966171168
  %v1680 = vunpack.c.0.s8 %v1679
  %v1681 = vlaneseq
  %v1682 = vshrl.u32 %v1681, 7
  %v1683 = vsub.s32 %v1680, %v1682
  %v1684 = vrot.slane %v1668, %v1683
  %v1686 = vunpack.c.l.s4 1966171168
  %v1687 = vunpack.c.0.s8 %v1686
  %v1688 = vlaneseq
  %v1689 = vshrl.u32 %v1688, 7
  %v1690 = vsub.s32 %v1687, %v1689
  %v1691 = vrot.slane %v1669, %v1690
  %v1693 = vunpack.c.l.s4 1966171168
  %v1694 = vunpack.c.0.s8 %v1693
  %v1695 = vlaneseq
  %v1696 = vshrl.u32 %v1695, 7
  %v1697 = vsub.s32 %v1694, %v1696
  %v1698 = vrot.slane %v1670, %v1697
  %v1699 = vcombine.high %v1677, %v1677
  %v1700 = vcombine.high %v1684, %v1684
  %v1701 = vcombine.high %v1691, %v1691
  %v1702 = vcombine.high %v1698, %v1698
  %v1703 = vcombine.low %v1379, %v1381
  %v1704 = vcombine.high %v1379, %v1381
  %v1706 = vunpack.c.l.s4 1966171168
  %v1707 = vunpack.c.0.s8 %v1706
  %v1708 = vlaneseq
  %v1709 = vshrl.u32 %v1708, 7
  %v1710 = vsub.s32 %v1707, %v1709
  %v1711 = vrot.slane %v1703, %v1710
  %v1713 = vunpack.c.l.s4 1966171168
  %v1714 = vunpack.c.0.s8 %v1713
  %v1715 = vlaneseq
  %v1716 = vshrl.u32 %v1715, 7
  %v1717 = vsub.s32 %v1714, %v1716
  %v1718 = vrot.slane %v1704, %v1717
  %v1719 = vcombine.high %v1711, %v1711
  %v1720 = vcombine.high %v1718, %v1718
  %v1722 = vunpack.c.l.s4 1966171168
  %v1723 = vunpack.c.0.s8 %v1722
  %v1724 = vlaneseq
  %v1725 = vshrl.u32 %v1724, 7
  %v1726 = vsub.s32 %v1723, %v1725
  %v1727 = vrot.slane %v1711, %v1726
  %v1729 = vunpack.c.l.s4 1966171168
  %v1730 = vunpack.c.0.s8 %v1729
  %v1731 = vlaneseq
  %v1732 = vshrl.u32 %v1731, 7
  %v1733 = vsub.s32 %v1730, %v1732
  %v1734 = vrot.slane %v1718, %v1733
  %v1736 = vunpack.c.l.s4 1966171168
  %v1737 = vunpack.c.0.s8 %v1736
  %v1738 = vlaneseq
  %v1739 = vshrl.u32 %v1738, 7
  %v1740 = vsub.s32 %v1737, %v1739
  %v1741 = vrot.slane %v1719, %v1740
  %v1743 = vunpack.c.l.s4 1966171168
  %v1744 = vunpack.c.0.s8 %v1743
  %v1745 = vlaneseq
  %v1746 = vshrl.u32 %v1745, 7
  %v1747 = vsub.s32 %v1744, %v1746
  %v1748 = vrot.slane %v1720, %v1747
  %v1749 = vcombine.high %v1727, %v1727
  %v1750 = vcombine.high %v1734, %v1734
  %v1751 = vcombine.high %v1741, %v1741
  %v1752 = vcombine.high %v1748, %v1748
  %v1753 = vcombine.low %v1383, %v1385
  %v1754 = vcombine.high %v1383, %v1385
  %v1756 = vunpack.c.l.s4 1966171168
  %v1757 = vunpack.c.0.s8 %v1756
  %v1758 = vlaneseq
  %v1759 = vshrl.u32 %v1758, 7
  %v1760 = vsub.s32 %v1757, %v1759
  %v1761 = vrot.slane %v1753, %v1760
  %v1763 = vunpack.c.l.s4 1966171168
  %v1764 = vunpack.c.0.s8 %v1763
  %v1765 = vlaneseq
  %v1766 = vshrl.u32 %v1765, 7
  %v1767 = vsub.s32 %v1764, %v1766
  %v1768 = vrot.slane %v1754, %v1767
  %v1769 = vcombine.high %v1761, %v1761
  %v1770 = vcombine.high %v1768, %v1768
  %v1772 = vunpack.c.l.s4 1966171168
  %v1773 = vunpack.c.0.s8 %v1772
  %v1774 = vlaneseq
  %v1775 = vshrl.u32 %v1774, 7
  %v1776 = vsub.s32 %v1773, %v1775
  %v1777 = vrot.slane %v1761, %v1776
  %v1779 = vunpack.c.l.s4 1966171168
  %v1780 = vunpack.c.0.s8 %v1779
  %v1781 = vlaneseq
  %v1782 = vshrl.u32 %v1781, 7
  %v1783 = vsub.s32 %v1780, %v1782
  %v1784 = vrot.slane %v1768, %v1783
  %v1786 = vunpack.c.l.s4 1966171168
  %v1787 = vunpack.c.0.s8 %v1786
  %v1788 = vlaneseq
  %v1789 = vshrl.u32 %v1788, 7
  %v1790 = vsub.s32 %v1787, %v1789
  %v1791 = vrot.slane %v1769, %v1790
  %v1793 = vunpack.c.l.s4 1966171168
  %v1794 = vunpack.c.0.s8 %v1793
  %v1795 = vlaneseq
  %v1796 = vshrl.u32 %v1795, 7
  %v1797 = vsub.s32 %v1794, %v1796
  %v1798 = vrot.slane %v1770, %v1797
  %v1799 = vcombine.high %v1777, %v1777
  %v1800 = vcombine.high %v1784, %v1784
  %v1801 = vcombine.high %v1791, %v1791
  %s1865 = scalar_lea.vmem %s1, 384
  %v1866 = vld [vmem:[%s1865] sm:$0xff]
  %v1867 = vld [vmem:[%s1865 + $0x8] sm:$0xff]
  %v1868 = vld [vmem:[%s1865 + $0x10] sm:$0xff]
  %v1869 = vld [vmem:[%s1865 + $0x18] sm:$0xff]
  %v1870 = vld [vmem:[%s1865 + $0x20] sm:$0xff]
  %v1871 = vld [vmem:[%s1865 + $0x28] sm:$0xff]
  %v1872 = vld [vmem:[%s1865 + $0x30] sm:$0xff]
  %v1873 = vld [vmem:[%s1865 + $0x38] sm:$0xff]
  %v1874 = vld [vmem:[%s1865 + $0x40] sm:$0xff]
  %v1875 = vld [vmem:[%s1865 + $0x48] sm:$0xff]
  %v1876 = vld [vmem:[%s1865 + $0x50] sm:$0xff]
  %v1877 = vld [vmem:[%s1865 + $0x58] sm:$0xff]
  %v1878 = vld [vmem:[%s1865 + $0x60] sm:$0xff]
  %v1879 = vld [vmem:[%s1865 + $0x68] sm:$0xff]
  %v1880 = vld [vmem:[%s1865 + $0x70] sm:$0xff]
  %v1881 = vld [vmem:[%s1865 + $0x78] sm:$0xff]
  %v1882 = vld [vmem:[%s1865 + $0x80] sm:$0xff]
  %v1883 = vld [vmem:[%s1865 + $0x88] sm:$0xff]
  %v1884 = vld [vmem:[%s1865 + $0x90] sm:$0xff]
  %v1885 = vld [vmem:[%s1865 + $0x98] sm:$0xff]
  %v1886 = vld [vmem:[%s1865 + $0xa0] sm:$0xff]
  %v1887 = vld [vmem:[%s1865 + $0xa8] sm:$0xff]
  %v1888 = vld [vmem:[%s1865 + $0xb0] sm:$0xff]
  %v1889 = vld [vmem:[%s1865 + $0xb8] sm:$0xff]
  %v1900 = vunpack.c.l.s4 1966171168
  %v1901 = vunpack.c.0.s8 %v1900
  %v1902 = vlaneseq
  %v1903 = vshrl.u32 %v1902, 7
  %v1904 = vsub.s32 %v1901, %v1903
  %v1905 = vrot.slane %v13, %v1904
  %v1907 = vunpack.c.l.s4 1966171168
  %v1908 = vunpack.c.0.s8 %v1907
  %v1909 = vlaneseq
  %v1910 = vshrl.u32 %v1909, 7
  %v1911 = vsub.s32 %v1908, %v1910
  %v1912 = vrot.slane %v1905, %v1911
  %v1914 = vunpack.c.l.s4 1966171168
  %v1915 = vunpack.c.0.s8 %v1914
  %v1916 = vlaneseq
  %v1917 = vshrl.u32 %v1916, 7
  %v1918 = vsub.s32 %v1915, %v1917
  %v1919 = vrot.slane %v15, %v1918
  %v1921 = vunpack.c.l.s4 1966171168
  %v1922 = vunpack.c.0.s8 %v1921
  %v1923 = vlaneseq
  %v1924 = vshrl.u32 %v1923, 7
  %v1925 = vsub.s32 %v1922, %v1924
  %v1926 = vrot.slane %v1919, %v1925
  %v1928 = vunpack.c.l.s4 1966171168
  %v1929 = vunpack.c.0.s8 %v1928
  %v1930 = vlaneseq
  %v1931 = vshrl.u32 %v1930, 7
  %v1932 = vsub.s32 %v1929, %v1931
  %v1933 = vrot.slane %v17, %v1932
  %v1935 = vunpack.c.l.s4 1966171168
  %v1936 = vunpack.c.0.s8 %v1935
  %v1937 = vlaneseq
  %v1938 = vshrl.u32 %v1937, 7
  %v1939 = vsub.s32 %v1936, %v1938
  %v1940 = vrot.slane %v1933, %v1939
  %v1942 = vunpack.c.l.s4 1966171168
  %v1943 = vunpack.c.0.s8 %v1942
  %v1944 = vlaneseq
  %v1945 = vshrl.u32 %v1944, 7
  %v1946 = vsub.s32 %v1943, %v1945
  %v1947 = vrot.slane %v19, %v1946
  %v1949 = vunpack.c.l.s4 1966171168
  %v1950 = vunpack.c.0.s8 %v1949
  %v1951 = vlaneseq
  %v1952 = vshrl.u32 %v1951, 7
  %v1953 = vsub.s32 %v1950, %v1952
  %v1954 = vrot.slane %v1947, %v1953
  %v1956 = vunpack.c.l.s4 1966171168
  %v1957 = vunpack.c.0.s8 %v1956
  %v1958 = vlaneseq
  %v1959 = vshrl.u32 %v1958, 7
  %v1960 = vsub.s32 %v1957, %v1959
  %v1961 = vrot.slane %v21, %v1960
  %v1963 = vunpack.c.l.s4 1966171168
  %v1964 = vunpack.c.0.s8 %v1963
  %v1965 = vlaneseq
  %v1966 = vshrl.u32 %v1965, 7
  %v1967 = vsub.s32 %v1964, %v1966
  %v1968 = vrot.slane %v1961, %v1967
  %v1970 = vunpack.c.l.s4 1966171168
  %v1971 = vunpack.c.0.s8 %v1970
  %v1972 = vlaneseq
  %v1973 = vshrl.u32 %v1972, 7
  %v1974 = vsub.s32 %v1971, %v1973
  %v1975 = vrot.slane %v23, %v1974
  %v1977 = vunpack.c.l.s4 1966171168
  %v1978 = vunpack.c.0.s8 %v1977
  %v1979 = vlaneseq
  %v1980 = vshrl.u32 %v1979, 7
  %v1981 = vsub.s32 %v1978, %v1980
  %v1982 = vrot.slane %v1975, %v1981
  %v1984 = vunpack.c.l.s4 1966171168
  %v1985 = vunpack.c.0.s8 %v1984
  %v1986 = vlaneseq
  %v1987 = vshrl.u32 %v1986, 7
  %v1988 = vsub.s32 %v1985, %v1987
  %v1989 = vrot.slane %v25, %v1988
  %v1991 = vunpack.c.l.s4 1966171168
  %v1992 = vunpack.c.0.s8 %v1991
  %v1993 = vlaneseq
  %v1994 = vshrl.u32 %v1993, 7
  %v1995 = vsub.s32 %v1992, %v1994
  %v1996 = vrot.slane %v1989, %v1995
  %v1998 = vunpack.c.l.s4 1966171168
  %v1999 = vunpack.c.0.s8 %v1998
  %v2000 = vlaneseq
  %v2001 = vshrl.u32 %v2000, 7
  %v2002 = vsub.s32 %v1999, %v2001
  %v2003 = vrot.slane %v27, %v2002
  %v2005 = vunpack.c.l.s4 1966171168
  %v2006 = vunpack.c.0.s8 %v2005
  %v2007 = vlaneseq
  %v2008 = vshrl.u32 %v2007, 7
  %v2009 = vsub.s32 %v2006, %v2008
  %v2010 = vrot.slane %v2003, %v2009
  %v2012 = vunpack.c.l.s4 1966171168
  %v2013 = vunpack.c.0.s8 %v2012
  %v2014 = vlaneseq
  %v2015 = vshrl.u32 %v2014, 7
  %v2016 = vsub.s32 %v2013, %v2015
  %v2017 = vrot.slane %v29, %v2016
  %v2019 = vunpack.c.l.s4 1966171168
  %v2020 = vunpack.c.0.s8 %v2019
  %v2021 = vlaneseq
  %v2022 = vshrl.u32 %v2021, 7
  %v2023 = vsub.s32 %v2020, %v2022
  %v2024 = vrot.slane %v2017, %v2023
  %v2025 = vunpack.i.l.s16 %v1912
  %v2026 = vunpack.i.l.s16 %v1926
  %v2027 = vunpack.i.l.s16 %v1940
  %v2028 = vunpack.i.l.s16 %v1954
  %v2029 = vunpack.i.l.s16 %v1968
  %v2030 = vunpack.i.l.s16 %v1982
  %v2031 = vunpack.i.l.s16 %v1996
  %v2032 = vunpack.i.l.s16 %v2010
  %v2033 = vunpack.i.l.s16 %v2024
  %v2034 = vpack.i.b16 %v310, %v309
  %v2035 = vpack.i.b16 %v312, %v2025
  %v2036 = vpack.i.b16 %v2026, %v317
  %v2037 = vpack.i.b16 %v324, %v323
  %v2038 = vpack.i.b16 %v326, %v2027
  %v2039 = vpack.i.b16 %v2028, %v331
  %v2040 = vpack.i.b16 %v338, %v337
  %v2041 = vpack.i.b16 %v340, %v2029
  %v2042 = vpack.i.b16 %v2030, %v345
  %v2043 = vpack.i.b16 %v352, %v351
  %v2044 = vpack.i.b16 %v354, %v2031
  %v2045 = vpack.i.b16 %v2032, %v359
  %v2046 = vpack.i.b16 %v366, %v365
  %v2048 = vcombine.low %v883, %v884
  %v2049 = vcombine.low %v2034, %v2035
  %v2050 = vcombine.low %v887, %v888
  %v2051 = vcombine.low %v2036, %v890
  %v2053 = vunpack.c.l.s4 1966171168
  %v2054 = vunpack.c.0.s8 %v2053
  %v2055 = vlaneseq
  %v2056 = vshrl.u32 %v2055, 7
  %v2057 = vsub.s32 %v2054, %v2056
  %v2058 = vrot.slane %v2048, %v2057
  %v2060 = vunpack.c.l.s4 1966171168
  %v2061 = vunpack.c.0.s8 %v2060
  %v2062 = vlaneseq
  %v2063 = vshrl.u32 %v2062, 7
  %v2064 = vsub.s32 %v2061, %v2063
  %v2065 = vrot.slane %v2049, %v2064
  %v2067 = vunpack.c.l.s4 1966171168
  %v2068 = vunpack.c.0.s8 %v2067
  %v2069 = vlaneseq
  %v2070 = vshrl.u32 %v2069, 7
  %v2071 = vsub.s32 %v2068, %v2070
  %v2072 = vrot.slane %v2050, %v2071
  %v2074 = vunpack.c.l.s4 1966171168
  %v2075 = vunpack.c.0.s8 %v2074
  %v2076 = vlaneseq
  %v2077 = vshrl.u32 %v2076, 7
  %v2078 = vsub.s32 %v2075, %v2077
  %v2079 = vrot.slane %v2051, %v2078
  %v2080 = vcombine.low %v2058, %v2065
  %v2081 = vcombine.high %v2058, %v2065
  %v2082 = vcombine.low %v2072, %v2079
  %v2083 = vcombine.high %v2072, %v2079
  %v2085 = vunpack.c.l.s4 1966171168
  %v2086 = vunpack.c.0.s8 %v2085
  %v2087 = vlaneseq
  %v2088 = vshrl.u32 %v2087, 7
  %v2089 = vsub.s32 %v2086, %v2088
  %v2090 = vrot.slane %v2080, %v2089
  %v2092 = vunpack.c.l.s4 1966171168
  %v2093 = vunpack.c.0.s8 %v2092
  %v2094 = vlaneseq
  %v2095 = vshrl.u32 %v2094, 7
  %v2096 = vsub.s32 %v2093, %v2095
  %v2097 = vrot.slane %v2081, %v2096
  %v2099 = vunpack.c.l.s4 1966171168
  %v2100 = vunpack.c.0.s8 %v2099
  %v2101 = vlaneseq
  %v2102 = vshrl.u32 %v2101, 7
  %v2103 = vsub.s32 %v2100, %v2102
  %v2104 = vrot.slane %v2082, %v2103
  %v2106 = vunpack.c.l.s4 1966171168
  %v2107 = vunpack.c.0.s8 %v2106
  %v2108 = vlaneseq
  %v2109 = vshrl.u32 %v2108, 7
  %v2110 = vsub.s32 %v2107, %v2109
  %v2111 = vrot.slane %v2083, %v2110
  %v2112 = vcombine.low %v2090, %v2104
  %v2113 = vcombine.low %v2097, %v2111
  %v2114 = vcombine.low %v891, %v2037
  %v2115 = vcombine.low %v2038, %v894
  %v2116 = vcombine.low %v895, %v2039
  %v2117 = vcombine.low %v897, %v898
  %v2119 = vunpack.c.l.s4 1966171168
  %v2120 = vunpack.c.0.s8 %v2119
  %v2121 = vlaneseq
  %v2122 = vshrl.u32 %v2121, 7
  %v2123 = vsub.s32 %v2120, %v2122
  %v2124 = vrot.slane %v2114, %v2123
  %v2126 = vunpack.c.l.s4 1966171168
  %v2127 = vunpack.c.0.s8 %v2126
  %v2128 = vlaneseq
  %v2129 = vshrl.u32 %v2128, 7
  %v2130 = vsub.s32 %v2127, %v2129
  %v2131 = vrot.slane %v2115, %v2130
  %v2133 = vunpack.c.l.s4 1966171168
  %v2134 = vunpack.c.0.s8 %v2133
  %v2135 = vlaneseq
  %v2136 = vshrl.u32 %v2135, 7
  %v2137 = vsub.s32 %v2134, %v2136
  %v2138 = vrot.slane %v2116, %v2137
  %v2140 = vunpack.c.l.s4 1966171168
  %v2141 = vunpack.c.0.s8 %v2140
  %v2142 = vlaneseq
  %v2143 = vshrl.u32 %v2142, 7
  %v2144 = vsub.s32 %v2141, %v2143
  %v2145 = vrot.slane %v2117, %v2144
  %v2146 = vcombine.low %v2124, %v2131
  %v2147 = vcombine.high %v2124, %v2131
  %v2148 = vcombine.low %v2138, %v2145
  %v2149 = vcombine.high %v2138, %v2145
  %v2151 = vunpack.c.l.s4 1966171168
  %v2152 = vunpack.c.0.s8 %v2151
  %v2153 = vlaneseq
  %v2154 = vshrl.u32 %v2153, 7
  %v2155 = vsub.s32 %v2152, %v2154
  %v2156 = vrot.slane %v2146, %v2155
  %v2158 = vunpack.c.l.s4 1966171168
  %v2159 = vunpack.c.0.s8 %v2158
  %v2160 = vlaneseq
  %v2161 = vshrl.u32 %v2160, 7
  %v2162 = vsub.s32 %v2159, %v2161
  %v2163 = vrot.slane %v2147, %v2162
  %v2165 = vunpack.c.l.s4 1966171168
  %v2166 = vunpack.c.0.s8 %v2165
  %v2167 = vlaneseq
  %v2168 = vshrl.u32 %v2167, 7
  %v2169 = vsub.s32 %v2166, %v2168
  %v2170 = vrot.slane %v2148, %v2169
  %v2172 = vunpack.c.l.s4 1966171168
  %v2173 = vunpack.c.0.s8 %v2172
  %v2174 = vlaneseq
  %v2175 = vshrl.u32 %v2174, 7
  %v2176 = vsub.s32 %v2173, %v2175
  %v2177 = vrot.slane %v2149, %v2176
  %v2178 = vcombine.low %v2156, %v2170
  %v2179 = vcombine.low %v2163, %v2177
  %v2180 = vcombine.low %v2040, %v2041
  %v2181 = vcombine.low %v901, %v902
  %v2182 = vcombine.low %v2042, %v904
  %v2183 = vcombine.low %v905, %v2043
  %v2185 = vunpack.c.l.s4 1966171168
  %v2186 = vunpack.c.0.s8 %v2185
  %v2187 = vlaneseq
  %v2188 = vshrl.u32 %v2187, 7
  %v2189 = vsub.s32 %v2186, %v2188
  %v2190 = vrot.slane %v2180, %v2189
  %v2192 = vunpack.c.l.s4 1966171168
  %v2193 = vunpack.c.0.s8 %v2192
  %v2194 = vlaneseq
  %v2195 = vshrl.u32 %v2194, 7
  %v2196 = vsub.s32 %v2193, %v2195
  %v2197 = vrot.slane %v2181, %v2196
  %v2199 = vunpack.c.l.s4 1966171168
  %v2200 = vunpack.c.0.s8 %v2199
  %v2201 = vlaneseq
  %v2202 = vshrl.u32 %v2201, 7
  %v2203 = vsub.s32 %v2200, %v2202
  %v2204 = vrot.slane %v2182, %v2203
  %v2206 = vunpack.c.l.s4 1966171168
  %v2207 = vunpack.c.0.s8 %v2206
  %v2208 = vlaneseq
  %v2209 = vshrl.u32 %v2208, 7
  %v2210 = vsub.s32 %v2207, %v2209
  %v2211 = vrot.slane %v2183, %v2210
  %v2212 = vcombine.low %v2190, %v2197
  %v2213 = vcombine.high %v2190, %v2197
  %v2214 = vcombine.low %v2204, %v2211
  %v2215 = vcombine.high %v2204, %v2211
  %v2217 = vunpack.c.l.s4 1966171168
  %v2218 = vunpack.c.0.s8 %v2217
  %v2219 = vlaneseq
  %v2220 = vshrl.u32 %v2219, 7
  %v2221 = vsub.s32 %v2218, %v2220
  %v2222 = vrot.slane %v2212, %v2221
  %v2224 = vunpack.c.l.s4 1966171168
  %v2225 = vunpack.c.0.s8 %v2224
  %v2226 = vlaneseq
  %v2227 = vshrl.u32 %v2226, 7
  %v2228 = vsub.s32 %v2225, %v2227
  %v2229 = vrot.slane %v2213, %v2228
  %v2231 = vunpack.c.l.s4 1966171168
  %v2232 = vunpack.c.0.s8 %v2231
  %v2233 = vlaneseq
  %v2234 = vshrl.u32 %v2233, 7
  %v2235 = vsub.s32 %v2232, %v2234
  %v2236 = vrot.slane %v2214, %v2235
  %v2238 = vunpack.c.l.s4 1966171168
  %v2239 = vunpack.c.0.s8 %v2238
  %v2240 = vlaneseq
  %v2241 = vshrl.u32 %v2240, 7
  %v2242 = vsub.s32 %v2239, %v2241
  %v2243 = vrot.slane %v2215, %v2242
  %v2244 = vcombine.low %v2222, %v2236
  %v2245 = vcombine.low %v2229, %v2243
  %v2246 = vcombine.low %v2044, %v908
  %v2247 = vcombine.low %v909, %v2045
  %v2248 = vcombine.low %v911, %v912
  %v2249 = vcombine.low %v2046, %v2033
  %v2251 = vunpack.c.l.s4 1966171168
  %v2252 = vunpack.c.0.s8 %v2251
  %v2253 = vlaneseq
  %v2254 = vshrl.u32 %v2253, 7
  %v2255 = vsub.s32 %v2252, %v2254
  %v2256 = vrot.slane %v2246, %v2255
  %v2258 = vunpack.c.l.s4 1966171168
  %v2259 = vunpack.c.0.s8 %v2258
  %v2260 = vlaneseq
  %v2261 = vshrl.u32 %v2260, 7
  %v2262 = vsub.s32 %v2259, %v2261
  %v2263 = vrot.slane %v2247, %v2262
  %v2265 = vunpack.c.l.s4 1966171168
  %v2266 = vunpack.c.0.s8 %v2265
  %v2267 = vlaneseq
  %v2268 = vshrl.u32 %v2267, 7
  %v2269 = vsub.s32 %v2266, %v2268
  %v2270 = vrot.slane %v2248, %v2269
  %v2272 = vunpack.c.l.s4 1966171168
  %v2273 = vunpack.c.0.s8 %v2272
  %v2274 = vlaneseq
  %v2275 = vshrl.u32 %v2274, 7
  %v2276 = vsub.s32 %v2273, %v2275
  %v2277 = vrot.slane %v2249, %v2276
  %v2278 = vcombine.low %v2256, %v2263
  %v2279 = vcombine.high %v2256, %v2263
  %v2280 = vcombine.low %v2270, %v2277
  %v2281 = vcombine.high %v2270, %v2277
  %v2283 = vunpack.c.l.s4 1966171168
  %v2284 = vunpack.c.0.s8 %v2283
  %v2285 = vlaneseq
  %v2286 = vshrl.u32 %v2285, 7
  %v2287 = vsub.s32 %v2284, %v2286
  %v2288 = vrot.slane %v2278, %v2287
  %v2290 = vunpack.c.l.s4 1966171168
  %v2291 = vunpack.c.0.s8 %v2290
  %v2292 = vlaneseq
  %v2293 = vshrl.u32 %v2292, 7
  %v2294 = vsub.s32 %v2291, %v2293
  %v2295 = vrot.slane %v2279, %v2294
  %v2297 = vunpack.c.l.s4 1966171168
  %v2298 = vunpack.c.0.s8 %v2297
  %v2299 = vlaneseq
  %v2300 = vshrl.u32 %v2299, 7
  %v2301 = vsub.s32 %v2298, %v2300
  %v2302 = vrot.slane %v2280, %v2301
  %v2304 = vunpack.c.l.s4 1966171168
  %v2305 = vunpack.c.0.s8 %v2304
  %v2306 = vlaneseq
  %v2307 = vshrl.u32 %v2306, 7
  %v2308 = vsub.s32 %v2305, %v2307
  %v2309 = vrot.slane %v2281, %v2308
  %v2310 = vcombine.low %v2288, %v2302
  %v2311 = vcombine.low %v2295, %v2309
  %v2340 = vunpack.c.l.b16 %v1866
  %v2341 = vunpack.c.h.b16 %v1866
  %v2342 = vunpack.c.l.b16 %v1867
  %v2343 = vunpack.c.h.b16 %v1867
  %v2344 = vunpack.c.l.b16 %v1868
  %v2345 = vunpack.c.h.b16 %v1868
  %v2346 = vunpack.c.l.b16 %v1869
  %v2347 = vunpack.c.h.b16 %v1869
  %v2348 = vunpack.c.l.b16 %v1870
  %v2349 = vunpack.c.h.b16 %v1870
  %v2350 = vunpack.c.l.b16 %v1871
  %v2351 = vunpack.c.h.b16 %v1871
  %v2352 = vunpack.c.l.b16 %v1872
  %v2353 = vunpack.c.h.b16 %v1872
  %v2354 = vunpack.c.l.b16 %v1873
  %v2355 = vunpack.c.h.b16 %v1873
  %v2356 = vunpack.c.l.b16 %v1874
  %v2357 = vunpack.c.h.b16 %v1874
  %v2358 = vunpack.c.l.b16 %v1875
  %v2359 = vunpack.c.h.b16 %v1875
  %v2360 = vunpack.c.l.b16 %v1876
  %v2361 = vunpack.c.h.b16 %v1876
  %v2362 = vunpack.c.l.b16 %v1877
  %v2363 = vunpack.c.h.b16 %v1877
  %v2364 = vunpack.c.l.b16 %v1878
  %v2365 = vunpack.c.h.b16 %v1878
  %v2366 = vunpack.c.l.b16 %v1879
  %v2367 = vunpack.c.h.b16 %v1879
  %v2368 = vunpack.c.l.b16 %v1880
  %v2369 = vunpack.c.h.b16 %v1880
  %v2370 = vunpack.c.l.b16 %v1881
  %v2371 = vunpack.c.h.b16 %v1881
  %v2372 = vunpack.c.l.b16 %v1882
  %v2373 = vunpack.c.h.b16 %v1882
  %v2374 = vunpack.c.l.b16 %v1883
  %v2375 = vunpack.c.h.b16 %v1883
  %v2376 = vunpack.c.l.b16 %v1884
  %v2377 = vunpack.c.h.b16 %v1884
  %v2378 = vunpack.c.l.b16 %v1885
  %v2379 = vunpack.c.h.b16 %v1885
  %v2380 = vunpack.c.l.b16 %v1886
  %v2381 = vunpack.c.h.b16 %v1886
  %v2382 = vunpack.c.l.b16 %v1887
  %v2383 = vunpack.c.h.b16 %v1887
  %v2384 = vunpack.c.l.b16 %v1888
  %v2385 = vunpack.c.h.b16 %v1888
  %v2386 = vunpack.c.l.b16 %v1889
  %v2387 = vunpack.c.h.b16 %v1889
  %v2388 = vpack.c.b16 %v2342, %v2340
  %v2389 = vpack.c.b16 %v2343, %v2341
  %v2390 = vpack.c.b16 %v2346, %v2344
  %v2391 = vpack.c.b16 %v2347, %v2345
  %v2392 = vpack.c.b16 %v2350, %v2348
  %v2393 = vpack.c.b16 %v2351, %v2349
  %v2394 = vpack.c.b16 %v2354, %v2352
  %v2395 = vpack.c.b16 %v2355, %v2353
  %v2396 = vpack.c.b16 %v2358, %v2356
  %v2397 = vpack.c.b16 %v2359, %v2357
  %v2398 = vpack.c.b16 %v2362, %v2360
  %v2399 = vpack.c.b16 %v2363, %v2361
  %v2400 = vpack.c.b16 %v2366, %v2364
  %v2401 = vpack.c.b16 %v2367, %v2365
  %v2402 = vpack.c.b16 %v2370, %v2368
  %v2403 = vpack.c.b16 %v2371, %v2369
  %v2404 = vpack.c.b16 %v2374, %v2372
  %v2405 = vpack.c.b16 %v2375, %v2373
  %v2406 = vpack.c.b16 %v2378, %v2376
  %v2407 = vpack.c.b16 %v2379, %v2377
  %v2408 = vpack.c.b16 %v2382, %v2380
  %v2409 = vpack.c.b16 %v2383, %v2381
  %v2410 = vpack.c.b16 %v2386, %v2384
  %v2411 = vpack.c.b16 %v2387, %v2385
  %v2437 = vsel %vm787, %v2113, 0
  %v2440 = vsel %vm787, %v2179, 0
  %v2443 = vsel %vm787, %v2245, 0
  %v2446 = vsel %vm787, %v2311, 0
  %2448 = vmatprep.subr.bf16.mxu0 %v2403
  %2449 = vmatpush1.bf16.msra.mxu0 %v2402
  %2450 = vmatprep.subr.bf16.mxu0 %v2401
  %2451 = vmatpush1.bf16.msra.mxu0 %v2400
  %2452 = vmatprep.subr.bf16.mxu0 %v2399
  %2453 = vmatpush1.bf16.msra.mxu0 %v2398
  %2454 = vmatprep.subr.bf16.mxu0 %v2397
  %2455 = vmatpush1.bf16.msra.mxu0 %v2396
  %2456 = vmatprep.subr.bf16.mxu0 %v2395
  %2457 = vmatpush1.bf16.msra.mxu0 %v2394
  %2458 = vmatprep.subr.bf16.mxu0 %v2393
  %2459 = vmatpush1.bf16.msra.mxu0 %v2392
  %2460 = vmatprep.subr.bf16.mxu0 %v2391
  %2461 = vmatpush1.bf16.msra.mxu0 %v2390
  %2462 = vmatprep.subr.bf16.mxu0 %v2389
  %2463 = vmatpush1.bf16.msra.mxu0 %v2388
  %2464 = vmatprep.subr.bf16.mxu0 0
  %2465 = vmatpush2.bf16.msra.mxu0 0
  %2466 = vmatprep.subr.bf16.mxu0 0
  %2467 = vmatpush2.bf16.msra.mxu0 0
  %2468 = vmatprep.subr.bf16.mxu0 0
  %2469 = vmatpush2.bf16.msra.mxu0 0
  %2470 = vmatprep.subr.bf16.mxu0 0
  %2471 = vmatpush2.bf16.msra.mxu0 0
  %2472 = vmatprep.subr.bf16.mxu0 %v2411
  %2473 = vmatpush2.bf16.msra.mxu0 %v2410
  %2474 = vmatprep.subr.bf16.mxu0 %v2409
  %2475 = vmatpush2.bf16.msra.mxu0 %v2408
  %2476 = vmatprep.subr.bf16.mxu0 %v2407
  %2477 = vmatpush2.bf16.msra.mxu0 %v2406
  %2478 = vmatprep.subr.bf16.mxu0 %v2405
  %2479 = vmatpush2.bf16.msra.mxu0 %v2404
  %2480 = vmatprep.mubr.bf16.mxu0 %v2437
  %2481 = vmatmul.mubr.bf16.gmra.mxu0 %v2112
  %v2482 = vpop.f32.mrf.mxu0
  %v2483 = vadd.f32 0.0, %v2482
  %v2484 = vpop.f32.mrf.mxu0
  %v2485 = vadd.f32 0.0, %v2484
  %v2486 = vpop.f32.mrf.mxu0
  %v2487 = vadd.f32 0.0, %v2486
  %v2488 = vpop.f32.mrf.mxu0
  %v2489 = vadd.f32 0.0, %v2488
  %2490 = vmatprep.mubr.bf16.mxu0 %v2440
  %2491 = vmatmul.mubr.bf16.gmra.mxu0 %v2178
  %v2492 = vpop.f32.mrf.mxu0
  %v2493 = vadd.f32 0.0, %v2492
  %v2494 = vpop.f32.mrf.mxu0
  %v2495 = vadd.f32 0.0, %v2494
  %v2496 = vpop.f32.mrf.mxu0
  %v2497 = vadd.f32 0.0, %v2496
  %v2498 = vpop.f32.mrf.mxu0
  %v2499 = vadd.f32 0.0, %v2498
  %2500 = vmatprep.mubr.bf16.mxu0 %v2443
  %2501 = vmatmul.mubr.bf16.gmra.mxu0 %v2244
  %v2502 = vpop.f32.mrf.mxu0
  %v2503 = vadd.f32 0.0, %v2502
  %v2504 = vpop.f32.mrf.mxu0
  %v2505 = vadd.f32 0.0, %v2504
  %v2506 = vpop.f32.mrf.mxu0
  %v2507 = vadd.f32 0.0, %v2506
  %v2508 = vpop.f32.mrf.mxu0
  %v2509 = vadd.f32 0.0, %v2508
  %2510 = vmatprep.mubr.bf16.mxu0 %v2446
  %2511 = vmatmul.mubr.bf16.gmra.mxu0 %v2310
  %v2512 = vpop.f32.mrf.mxu0
  %v2513 = vadd.f32 0.0, %v2512
  %v2514 = vpop.f32.mrf.mxu0
  %v2515 = vadd.f32 0.0, %v2514
  %v2516 = vpop.f32.mrf.mxu0
  %v2517 = vadd.f32 0.0, %v2516
  %v2518 = vpop.f32.mrf.mxu0
  %v2519 = vadd.f32 0.0, %v2518
  %2520 = vdwg.mxu0
  %v2537 = vcombine.low %v2483, %v2485
  %v2538 = vcombine.high %v2483, %v2485
  %v2540 = vunpack.c.l.s4 1966171168
  %v2541 = vunpack.c.0.s8 %v2540
  %v2542 = vlaneseq
  %v2543 = vshrl.u32 %v2542, 7
  %v2544 = vsub.s32 %v2541, %v2543
  %v2545 = vrot.slane %v2537, %v2544
  %v2547 = vunpack.c.l.s4 1966171168
  %v2548 = vunpack.c.0.s8 %v2547
  %v2549 = vlaneseq
  %v2550 = vshrl.u32 %v2549, 7
  %v2551 = vsub.s32 %v2548, %v2550
  %v2552 = vrot.slane %v2538, %v2551
  %v2553 = vcombine.high %v2545, %v2545
  %v2554 = vcombine.high %v2552, %v2552
  %v2556 = vunpack.c.l.s4 1966171168
  %v2557 = vunpack.c.0.s8 %v2556
  %v2558 = vlaneseq
  %v2559 = vshrl.u32 %v2558, 7
  %v2560 = vsub.s32 %v2557, %v2559
  %v2561 = vrot.slane %v2545, %v2560
  %v2563 = vunpack.c.l.s4 1966171168
  %v2564 = vunpack.c.0.s8 %v2563
  %v2565 = vlaneseq
  %v2566 = vshrl.u32 %v2565, 7
  %v2567 = vsub.s32 %v2564, %v2566
  %v2568 = vrot.slane %v2552, %v2567
  %v2570 = vunpack.c.l.s4 1966171168
  %v2571 = vunpack.c.0.s8 %v2570
  %v2572 = vlaneseq
  %v2573 = vshrl.u32 %v2572, 7
  %v2574 = vsub.s32 %v2571, %v2573
  %v2575 = vrot.slane %v2553, %v2574
  %v2577 = vunpack.c.l.s4 1966171168
  %v2578 = vunpack.c.0.s8 %v2577
  %v2579 = vlaneseq
  %v2580 = vshrl.u32 %v2579, 7
  %v2581 = vsub.s32 %v2578, %v2580
  %v2582 = vrot.slane %v2554, %v2581
  %v2583 = vcombine.high %v2561, %v2561
  %v2584 = vcombine.high %v2568, %v2568
  %v2585 = vcombine.high %v2575, %v2575
  %v2586 = vcombine.high %v2582, %v2582
  %v2587 = vcombine.low %v2487, %v2489
  %v2588 = vcombine.high %v2487, %v2489
  %v2590 = vunpack.c.l.s4 1966171168
  %v2591 = vunpack.c.0.s8 %v2590
  %v2592 = vlaneseq
  %v2593 = vshrl.u32 %v2592, 7
  %v2594 = vsub.s32 %v2591, %v2593
  %v2595 = vrot.slane %v2587, %v2594
  %v2597 = vunpack.c.l.s4 1966171168
  %v2598 = vunpack.c.0.s8 %v2597
  %v2599 = vlaneseq
  %v2600 = vshrl.u32 %v2599, 7
  %v2601 = vsub.s32 %v2598, %v2600
  %v2602 = vrot.slane %v2588, %v2601
  %v2603 = vcombine.high %v2595, %v2595
  %v2604 = vcombine.high %v2602, %v2602
  %v2606 = vunpack.c.l.s4 1966171168
  %v2607 = vunpack.c.0.s8 %v2606
  %v2608 = vlaneseq
  %v2609 = vshrl.u32 %v2608, 7
  %v2610 = vsub.s32 %v2607, %v2609
  %v2611 = vrot.slane %v2595, %v2610
  %v2613 = vunpack.c.l.s4 1966171168
  %v2614 = vunpack.c.0.s8 %v2613
  %v2615 = vlaneseq
  %v2616 = vshrl.u32 %v2615, 7
  %v2617 = vsub.s32 %v2614, %v2616
  %v2618 = vrot.slane %v2602, %v2617
  %v2620 = vunpack.c.l.s4 1966171168
  %v2621 = vunpack.c.0.s8 %v2620
  %v2622 = vlaneseq
  %v2623 = vshrl.u32 %v2622, 7
  %v2624 = vsub.s32 %v2621, %v2623
  %v2625 = vrot.slane %v2603, %v2624
  %v2627 = vunpack.c.l.s4 1966171168
  %v2628 = vunpack.c.0.s8 %v2627
  %v2629 = vlaneseq
  %v2630 = vshrl.u32 %v2629, 7
  %v2631 = vsub.s32 %v2628, %v2630
  %v2632 = vrot.slane %v2604, %v2631
  %v2633 = vcombine.high %v2611, %v2611
  %v2634 = vcombine.high %v2618, %v2618
  %v2635 = vcombine.high %v2625, %v2625
  %v2636 = vcombine.high %v2632, %v2632
  %v2637 = vcombine.low %v2493, %v2495
  %v2638 = vcombine.high %v2493, %v2495
  %v2640 = vunpack.c.l.s4 1966171168
  %v2641 = vunpack.c.0.s8 %v2640
  %v2642 = vlaneseq
  %v2643 = vshrl.u32 %v2642, 7
  %v2644 = vsub.s32 %v2641, %v2643
  %v2645 = vrot.slane %v2637, %v2644
  %v2647 = vunpack.c.l.s4 1966171168
  %v2648 = vunpack.c.0.s8 %v2647
  %v2649 = vlaneseq
  %v2650 = vshrl.u32 %v2649, 7
  %v2651 = vsub.s32 %v2648, %v2650
  %v2652 = vrot.slane %v2638, %v2651
  %v2653 = vcombine.high %v2645, %v2645
  %v2654 = vcombine.high %v2652, %v2652
  %v2656 = vunpack.c.l.s4 1966171168
  %v2657 = vunpack.c.0.s8 %v2656
  %v2658 = vlaneseq
  %v2659 = vshrl.u32 %v2658, 7
  %v2660 = vsub.s32 %v2657, %v2659
  %v2661 = vrot.slane %v2645, %v2660
  %v2663 = vunpack.c.l.s4 1966171168
  %v2664 = vunpack.c.0.s8 %v2663
  %v2665 = vlaneseq
  %v2666 = vshrl.u32 %v2665, 7
  %v2667 = vsub.s32 %v2664, %v2666
  %v2668 = vrot.slane %v2652, %v2667
  %v2670 = vunpack.c.l.s4 1966171168
  %v2671 = vunpack.c.0.s8 %v2670
  %v2672 = vlaneseq
  %v2673 = vshrl.u32 %v2672, 7
  %v2674 = vsub.s32 %v2671, %v2673
  %v2675 = vrot.slane %v2653, %v2674
  %v2677 = vunpack.c.l.s4 1966171168
  %v2678 = vunpack.c.0.s8 %v2677
  %v2679 = vlaneseq
  %v2680 = vshrl.u32 %v2679, 7
  %v2681 = vsub.s32 %v2678, %v2680
  %v2682 = vrot.slane %v2654, %v2681
  %v2683 = vcombine.high %v2661, %v2661
  %v2684 = vcombine.high %v2668, %v2668
  %v2685 = vcombine.high %v2675, %v2675
  %v2686 = vcombine.high %v2682, %v2682
  %v2687 = vcombine.low %v2497, %v2499
  %v2688 = vcombine.high %v2497, %v2499
  %v2690 = vunpack.c.l.s4 1966171168
  %v2691 = vunpack.c.0.s8 %v2690
  %v2692 = vlaneseq
  %v2693 = vshrl.u32 %v2692, 7
  %v2694 = vsub.s32 %v2691, %v2693
  %v2695 = vrot.slane %v2687, %v2694
  %v2697 = vunpack.c.l.s4 1966171168
  %v2698 = vunpack.c.0.s8 %v2697
  %v2699 = vlaneseq
  %v2700 = vshrl.u32 %v2699, 7
  %v2701 = vsub.s32 %v2698, %v2700
  %v2702 = vrot.slane %v2688, %v2701
  %v2703 = vcombine.high %v2695, %v2695
  %v2704 = vcombine.high %v2702, %v2702
  %v2706 = vunpack.c.l.s4 1966171168
  %v2707 = vunpack.c.0.s8 %v2706
  %v2708 = vlaneseq
  %v2709 = vshrl.u32 %v2708, 7
  %v2710 = vsub.s32 %v2707, %v2709
  %v2711 = vrot.slane %v2695, %v2710
  %v2713 = vunpack.c.l.s4 1966171168
  %v2714 = vunpack.c.0.s8 %v2713
  %v2715 = vlaneseq
  %v2716 = vshrl.u32 %v2715, 7
  %v2717 = vsub.s32 %v2714, %v2716
  %v2718 = vrot.slane %v2702, %v2717
  %v2720 = vunpack.c.l.s4 1966171168
  %v2721 = vunpack.c.0.s8 %v2720
  %v2722 = vlaneseq
  %v2723 = vshrl.u32 %v2722, 7
  %v2724 = vsub.s32 %v2721, %v2723
  %v2725 = vrot.slane %v2703, %v2724
  %v2727 = vunpack.c.l.s4 1966171168
  %v2728 = vunpack.c.0.s8 %v2727
  %v2729 = vlaneseq
  %v2730 = vshrl.u32 %v2729, 7
  %v2731 = vsub.s32 %v2728, %v2730
  %v2732 = vrot.slane %v2704, %v2731
  %v2733 = vcombine.high %v2711, %v2711
  %v2734 = vcombine.high %v2718, %v2718
  %v2735 = vcombine.high %v2725, %v2725
  %v2736 = vcombine.high %v2732, %v2732
  %v2737 = vcombine.low %v2503, %v2505
  %v2738 = vcombine.high %v2503, %v2505
  %v2740 = vunpack.c.l.s4 1966171168
  %v2741 = vunpack.c.0.s8 %v2740
  %v2742 = vlaneseq
  %v2743 = vshrl.u32 %v2742, 7
  %v2744 = vsub.s32 %v2741, %v2743
  %v2745 = vrot.slane %v2737, %v2744
  %v2747 = vunpack.c.l.s4 1966171168
  %v2748 = vunpack.c.0.s8 %v2747
  %v2749 = vlaneseq
  %v2750 = vshrl.u32 %v2749, 7
  %v2751 = vsub.s32 %v2748, %v2750
  %v2752 = vrot.slane %v2738, %v2751
  %v2753 = vcombine.high %v2745, %v2745
  %v2754 = vcombine.high %v2752, %v2752
  %v2756 = vunpack.c.l.s4 1966171168
  %v2757 = vunpack.c.0.s8 %v2756
  %v2758 = vlaneseq
  %v2759 = vshrl.u32 %v2758, 7
  %v2760 = vsub.s32 %v2757, %v2759
  %v2761 = vrot.slane %v2745, %v2760
  %v2763 = vunpack.c.l.s4 1966171168
  %v2764 = vunpack.c.0.s8 %v2763
  %v2765 = vlaneseq
  %v2766 = vshrl.u32 %v2765, 7
  %v2767 = vsub.s32 %v2764, %v2766
  %v2768 = vrot.slane %v2752, %v2767
  %v2770 = vunpack.c.l.s4 1966171168
  %v2771 = vunpack.c.0.s8 %v2770
  %v2772 = vlaneseq
  %v2773 = vshrl.u32 %v2772, 7
  %v2774 = vsub.s32 %v2771, %v2773
  %v2775 = vrot.slane %v2753, %v2774
  %v2777 = vunpack.c.l.s4 1966171168
  %v2778 = vunpack.c.0.s8 %v2777
  %v2779 = vlaneseq
  %v2780 = vshrl.u32 %v2779, 7
  %v2781 = vsub.s32 %v2778, %v2780
  %v2782 = vrot.slane %v2754, %v2781
  %v2783 = vcombine.high %v2761, %v2761
  %v2784 = vcombine.high %v2768, %v2768
  %v2785 = vcombine.high %v2775, %v2775
  %v2786 = vcombine.high %v2782, %v2782
  %v2787 = vcombine.low %v2507, %v2509
  %v2788 = vcombine.high %v2507, %v2509
  %v2790 = vunpack.c.l.s4 1966171168
  %v2791 = vunpack.c.0.s8 %v2790
  %v2792 = vlaneseq
  %v2793 = vshrl.u32 %v2792, 7
  %v2794 = vsub.s32 %v2791, %v2793
  %v2795 = vrot.slane %v2787, %v2794
  %v2797 = vunpack.c.l.s4 1966171168
  %v2798 = vunpack.c.0.s8 %v2797
  %v2799 = vlaneseq
  %v2800 = vshrl.u32 %v2799, 7
  %v2801 = vsub.s32 %v2798, %v2800
  %v2802 = vrot.slane %v2788, %v2801
  %v2803 = vcombine.high %v2795, %v2795
  %v2804 = vcombine.high %v2802, %v2802
  %v2806 = vunpack.c.l.s4 1966171168
  %v2807 = vunpack.c.0.s8 %v2806
  %v2808 = vlaneseq
  %v2809 = vshrl.u32 %v2808, 7
  %v2810 = vsub.s32 %v2807, %v2809
  %v2811 = vrot.slane %v2795, %v2810
  %v2813 = vunpack.c.l.s4 1966171168
  %v2814 = vunpack.c.0.s8 %v2813
  %v2815 = vlaneseq
  %v2816 = vshrl.u32 %v2815, 7
  %v2817 = vsub.s32 %v2814, %v2816
  %v2818 = vrot.slane %v2802, %v2817
  %v2820 = vunpack.c.l.s4 1966171168
  %v2821 = vunpack.c.0.s8 %v2820
  %v2822 = vlaneseq
  %v2823 = vshrl.u32 %v2822, 7
  %v2824 = vsub.s32 %v2821, %v2823
  %v2825 = vrot.slane %v2803, %v2824
  %v2827 = vunpack.c.l.s4 1966171168
  %v2828 = vunpack.c.0.s8 %v2827
  %v2829 = vlaneseq
  %v2830 = vshrl.u32 %v2829, 7
  %v2831 = vsub.s32 %v2828, %v2830
  %v2832 = vrot.slane %v2804, %v2831
  %v2833 = vcombine.high %v2811, %v2811
  %v2834 = vcombine.high %v2818, %v2818
  %v2835 = vcombine.high %v2825, %v2825
  %v2836 = vcombine.high %v2832, %v2832
  %v2837 = vcombine.low %v2513, %v2515
  %v2838 = vcombine.high %v2513, %v2515
  %v2840 = vunpack.c.l.s4 1966171168
  %v2841 = vunpack.c.0.s8 %v2840
  %v2842 = vlaneseq
  %v2843 = vshrl.u32 %v2842, 7
  %v2844 = vsub.s32 %v2841, %v2843
  %v2845 = vrot.slane %v2837, %v2844
  %v2847 = vunpack.c.l.s4 1966171168
  %v2848 = vunpack.c.0.s8 %v2847
  %v2849 = vlaneseq
  %v2850 = vshrl.u32 %v2849, 7
  %v2851 = vsub.s32 %v2848, %v2850
  %v2852 = vrot.slane %v2838, %v2851
  %v2853 = vcombine.high %v2845, %v2845
  %v2854 = vcombine.high %v2852, %v2852
  %v2856 = vunpack.c.l.s4 1966171168
  %v2857 = vunpack.c.0.s8 %v2856
  %v2858 = vlaneseq
  %v2859 = vshrl.u32 %v2858, 7
  %v2860 = vsub.s32 %v2857, %v2859
  %v2861 = vrot.slane %v2845, %v2860
  %v2863 = vunpack.c.l.s4 1966171168
  %v2864 = vunpack.c.0.s8 %v2863
  %v2865 = vlaneseq
  %v2866 = vshrl.u32 %v2865, 7
  %v2867 = vsub.s32 %v2864, %v2866
  %v2868 = vrot.slane %v2852, %v2867
  %v2870 = vunpack.c.l.s4 1966171168
  %v2871 = vunpack.c.0.s8 %v2870
  %v2872 = vlaneseq
  %v2873 = vshrl.u32 %v2872, 7
  %v2874 = vsub.s32 %v2871, %v2873
  %v2875 = vrot.slane %v2853, %v2874
  %v2877 = vunpack.c.l.s4 1966171168
  %v2878 = vunpack.c.0.s8 %v2877
  %v2879 = vlaneseq
  %v2880 = vshrl.u32 %v2879, 7
  %v2881 = vsub.s32 %v2878, %v2880
  %v2882 = vrot.slane %v2854, %v2881
  %v2883 = vcombine.high %v2861, %v2861
  %v2884 = vcombine.high %v2868, %v2868
  %v2885 = vcombine.high %v2875, %v2875
  %v2886 = vcombine.high %v2882, %v2882
  %v2887 = vcombine.low %v2517, %v2519
  %v2888 = vcombine.high %v2517, %v2519
  %v2890 = vunpack.c.l.s4 1966171168
  %v2891 = vunpack.c.0.s8 %v2890
  %v2892 = vlaneseq
  %v2893 = vshrl.u32 %v2892, 7
  %v2894 = vsub.s32 %v2891, %v2893
  %v2895 = vrot.slane %v2887, %v2894
  %v2897 = vunpack.c.l.s4 1966171168
  %v2898 = vunpack.c.0.s8 %v2897
  %v2899 = vlaneseq
  %v2900 = vshrl.u32 %v2899, 7
  %v2901 = vsub.s32 %v2898, %v2900
  %v2902 = vrot.slane %v2888, %v2901
  %v2903 = vcombine.high %v2895, %v2895
  %v2904 = vcombine.high %v2902, %v2902
  %v2906 = vunpack.c.l.s4 1966171168
  %v2907 = vunpack.c.0.s8 %v2906
  %v2908 = vlaneseq
  %v2909 = vshrl.u32 %v2908, 7
  %v2910 = vsub.s32 %v2907, %v2909
  %v2911 = vrot.slane %v2895, %v2910
  %v2913 = vunpack.c.l.s4 1966171168
  %v2914 = vunpack.c.0.s8 %v2913
  %v2915 = vlaneseq
  %v2916 = vshrl.u32 %v2915, 7
  %v2917 = vsub.s32 %v2914, %v2916
  %v2918 = vrot.slane %v2902, %v2917
  %v2920 = vunpack.c.l.s4 1966171168
  %v2921 = vunpack.c.0.s8 %v2920
  %v2922 = vlaneseq
  %v2923 = vshrl.u32 %v2922, 7
  %v2924 = vsub.s32 %v2921, %v2923
  %v2925 = vrot.slane %v2903, %v2924
  %v2927 = vunpack.c.l.s4 1966171168
  %v2928 = vunpack.c.0.s8 %v2927
  %v2929 = vlaneseq
  %v2930 = vshrl.u32 %v2929, 7
  %v2931 = vsub.s32 %v2928, %v2930
  %v2932 = vrot.slane %v2904, %v2931
  %v2933 = vcombine.high %v2911, %v2911
  %v2934 = vcombine.high %v2918, %v2918
  %v2935 = vcombine.high %v2925, %v2925
  %v2999 = vadd.f32 %v1427, %v2561
  %v3000 = vadd.f32 %v1441, %v2575
  %v3001 = vadd.f32 %v1449, %v2583
  %v3002 = vadd.f32 %v1451, %v2585
  %v3003 = vadd.f32 %v1434, %v2568
  %v3004 = vadd.f32 %v1448, %v2582
  %v3005 = vadd.f32 %v1450, %v2584
  %v3006 = vadd.f32 %v1452, %v2586
  %v3007 = vadd.f32 %v1477, %v2611
  %v3008 = vadd.f32 %v1491, %v2625
  %v3009 = vadd.f32 %v1499, %v2633
  %v3010 = vadd.f32 %v1501, %v2635
  %v3011 = vadd.f32 %v1484, %v2618
  %v3012 = vadd.f32 %v1498, %v2632
  %v3013 = vadd.f32 %v1500, %v2634
  %v3014 = vadd.f32 %v1502, %v2636
  %v3015 = vadd.f32 %v1527, %v2661
  %v3016 = vadd.f32 %v1541, %v2675
  %v3017 = vadd.f32 %v1549, %v2683
  %v3018 = vadd.f32 %v1551, %v2685
  %v3019 = vadd.f32 %v1534, %v2668
  %v3020 = vadd.f32 %v1548, %v2682
  %v3021 = vadd.f32 %v1550, %v2684
  %v3022 = vadd.f32 %v1552, %v2686
  %v3023 = vadd.f32 %v1577, %v2711
  %v3024 = vadd.f32 %v1591, %v2725
  %v3025 = vadd.f32 %v1599, %v2733
  %v3026 = vadd.f32 %v1601, %v2735
  %v3027 = vadd.f32 %v1584, %v2718
  %v3028 = vadd.f32 %v1598, %v2732
  %v3029 = vadd.f32 %v1600, %v2734
  %v3030 = vadd.f32 %v1602, %v2736
  %v3031 = vadd.f32 %v1627, %v2761
  %v3032 = vadd.f32 %v1641, %v2775
  %v3033 = vadd.f32 %v1649, %v2783
  %v3034 = vadd.f32 %v1651, %v2785
  %v3035 = vadd.f32 %v1634, %v2768
  %v3036 = vadd.f32 %v1648, %v2782
  %v3037 = vadd.f32 %v1650, %v2784
  %v3038 = vadd.f32 %v1652, %v2786
  %v3039 = vadd.f32 %v1677, %v2811
  %v3040 = vadd.f32 %v1691, %v2825
  %v3041 = vadd.f32 %v1699, %v2833
  %v3042 = vadd.f32 %v1701, %v2835
  %v3043 = vadd.f32 %v1684, %v2818
  %v3044 = vadd.f32 %v1698, %v2832
  %v3045 = vadd.f32 %v1700, %v2834
  %v3046 = vadd.f32 %v1702, %v2836
  %v3047 = vadd.f32 %v1727, %v2861
  %v3048 = vadd.f32 %v1741, %v2875
  %v3049 = vadd.f32 %v1749, %v2883
  %v3050 = vadd.f32 %v1751, %v2885
  %v3051 = vadd.f32 %v1734, %v2868
  %v3052 = vadd.f32 %v1748, %v2882
  %v3053 = vadd.f32 %v1750, %v2884
  %v3054 = vadd.f32 %v1752, %v2886
  %v3055 = vadd.f32 %v1777, %v2911
  %v3056 = vadd.f32 %v1791, %v2925
  %v3057 = vadd.f32 %v1799, %v2933
  %v3058 = vadd.f32 %v1801, %v2935
  %v3059 = vadd.f32 %v1784, %v2918
  %v3060 = vadd.f32 %v1798, %v2932
  %v3061 = vadd.f32 %v1800, %v2934
  %3111 = vrot.lane.b32.xlu0 %v3006, 80
  %v3112 = vpop.permute.xlu0 %3111
  %3113 = vrot.lane.b32.xlu0 %v3007, 80
  %v3114 = vpop.permute.xlu0 %3113
  %3115 = vrot.lane.b32.xlu0 %v3008, 80
  %v3116 = vpop.permute.xlu0 %3115
  %3117 = vrot.lane.b32.xlu0 %v3009, 80
  %v3118 = vpop.permute.xlu0 %3117
  %3119 = vrot.lane.b32.xlu0 %v3010, 80
  %v3120 = vpop.permute.xlu0 %3119
  %3121 = vrot.lane.b32.xlu0 %v3011, 80
  %v3122 = vpop.permute.xlu0 %3121
  %3123 = vrot.lane.b32.xlu0 %v3012, 80
  %v3124 = vpop.permute.xlu0 %3123
  %3125 = vrot.lane.b32.xlu0 %v3013, 80
  %v3126 = vpop.permute.xlu0 %3125
  %3127 = vrot.lane.b32.xlu0 %v3014, 80
  %v3128 = vpop.permute.xlu0 %3127
  %3129 = vrot.lane.b32.xlu0 %v3015, 80
  %v3130 = vpop.permute.xlu0 %3129
  %3131 = vrot.lane.b32.xlu0 %v3016, 80
  %v3132 = vpop.permute.xlu0 %3131
  %3133 = vrot.lane.b32.xlu0 %v3017, 80
  %v3134 = vpop.permute.xlu0 %3133
  %3135 = vrot.lane.b32.xlu0 %v3018, 80
  %v3136 = vpop.permute.xlu0 %3135
  %3137 = vrot.lane.b32.xlu0 %v3019, 80
  %v3138 = vpop.permute.xlu0 %3137
  %3139 = vrot.lane.b32.xlu0 %v3020, 80
  %v3140 = vpop.permute.xlu0 %3139
  %3141 = vrot.lane.b32.xlu0 %v3021, 80
  %v3142 = vpop.permute.xlu0 %3141
  %3143 = vrot.lane.b32.xlu0 %v3022, 80
  %v3144 = vpop.permute.xlu0 %3143
  %3145 = vrot.lane.b32.xlu0 %v3023, 80
  %v3146 = vpop.permute.xlu0 %3145
  %3147 = vrot.lane.b32.xlu0 %v3024, 80
  %v3148 = vpop.permute.xlu0 %3147
  %3149 = vrot.lane.b32.xlu0 %v3025, 80
  %v3150 = vpop.permute.xlu0 %3149
  %3151 = vrot.lane.b32.xlu0 %v3026, 80
  %v3152 = vpop.permute.xlu0 %3151
  %3153 = vrot.lane.b32.xlu0 %v3027, 80
  %v3154 = vpop.permute.xlu0 %3153
  %3155 = vrot.lane.b32.xlu0 %v3028, 80
  %v3156 = vpop.permute.xlu0 %3155
  %3157 = vrot.lane.b32.xlu0 %v3029, 80
  %v3158 = vpop.permute.xlu0 %3157
  %3159 = vrot.lane.b32.xlu0 %v3030, 80
  %v3160 = vpop.permute.xlu0 %3159
  %3161 = vrot.lane.b32.xlu0 %v3031, 80
  %v3162 = vpop.permute.xlu0 %3161
  %3163 = vrot.lane.b32.xlu0 %v3032, 80
  %v3164 = vpop.permute.xlu0 %3163
  %3165 = vrot.lane.b32.xlu0 %v3033, 80
  %v3166 = vpop.permute.xlu0 %3165
  %3167 = vrot.lane.b32.xlu0 %v3034, 80
  %v3168 = vpop.permute.xlu0 %3167
  %3169 = vrot.lane.b32.xlu0 %v3035, 80
  %v3170 = vpop.permute.xlu0 %3169
  %3171 = vrot.lane.b32.xlu0 %v3036, 80
  %v3172 = vpop.permute.xlu0 %3171
  %3173 = vrot.lane.b32.xlu0 %v3037, 80
  %v3174 = vpop.permute.xlu0 %3173
  %3175 = vrot.lane.b32.xlu0 %v3038, 80
  %v3176 = vpop.permute.xlu0 %3175
  %3177 = vrot.lane.b32.xlu0 %v3039, 80
  %v3178 = vpop.permute.xlu0 %3177
  %3179 = vrot.lane.b32.xlu0 %v3040, 80
  %v3180 = vpop.permute.xlu0 %3179
  %3181 = vrot.lane.b32.xlu0 %v3041, 80
  %v3182 = vpop.permute.xlu0 %3181
  %3183 = vrot.lane.b32.xlu0 %v3042, 80
  %v3184 = vpop.permute.xlu0 %3183
  %3185 = vrot.lane.b32.xlu0 %v3043, 80
  %v3186 = vpop.permute.xlu0 %3185
  %3187 = vrot.lane.b32.xlu0 %v3044, 80
  %v3188 = vpop.permute.xlu0 %3187
  %3189 = vrot.lane.b32.xlu0 %v3045, 80
  %v3190 = vpop.permute.xlu0 %3189
  %3191 = vrot.lane.b32.xlu0 %v3046, 80
  %v3192 = vpop.permute.xlu0 %3191
  %3193 = vrot.lane.b32.xlu0 %v3047, 80
  %v3194 = vpop.permute.xlu0 %3193
  %3195 = vrot.lane.b32.xlu0 %v3048, 80
  %v3196 = vpop.permute.xlu0 %3195
  %3197 = vrot.lane.b32.xlu0 %v3049, 80
  %v3198 = vpop.permute.xlu0 %3197
  %3199 = vrot.lane.b32.xlu0 %v3050, 80
  %v3200 = vpop.permute.xlu0 %3199
  %3201 = vrot.lane.b32.xlu0 %v3051, 80
  %v3202 = vpop.permute.xlu0 %3201
  %3203 = vrot.lane.b32.xlu0 %v3052, 80
  %v3204 = vpop.permute.xlu0 %3203
  %3205 = vrot.lane.b32.xlu0 %v3053, 80
  %v3206 = vpop.permute.xlu0 %3205
  %3207 = vrot.lane.b32.xlu0 %v3054, 80
  %v3208 = vpop.permute.xlu0 %3207
  %v3258 = vadd.f32 %v2999, %v3112
  %v3259 = vadd.f32 %v3000, %v3114
  %v3260 = vadd.f32 %v3001, %v3116
  %v3261 = vadd.f32 %v3002, %v3118
  %v3262 = vadd.f32 %v3003, %v3120
  %v3263 = vadd.f32 %v3004, %v3122
  %v3264 = vadd.f32 %v3005, %v3124
  %v3265 = vadd.f32 %v3006, %v3126
  %v3266 = vadd.f32 %v3007, %v3128
  %v3267 = vadd.f32 %v3008, %v3130
  %v3268 = vadd.f32 %v3009, %v3132
  %v3269 = vadd.f32 %v3010, %v3134
  %v3270 = vadd.f32 %v3011, %v3136
  %v3271 = vadd.f32 %v3012, %v3138
  %v3272 = vadd.f32 %v3013, %v3140
  %v3273 = vadd.f32 %v3014, %v3142
  %v3274 = vadd.f32 %v3015, %v3144
  %v3275 = vadd.f32 %v3016, %v3146
  %v3276 = vadd.f32 %v3017, %v3148
  %v3277 = vadd.f32 %v3018, %v3150
  %v3278 = vadd.f32 %v3019, %v3152
  %v3279 = vadd.f32 %v3020, %v3154
  %v3280 = vadd.f32 %v3021, %v3156
  %v3281 = vadd.f32 %v3022, %v3158
  %v3282 = vadd.f32 %v3023, %v3160
  %v3283 = vadd.f32 %v3024, %v3162
  %v3284 = vadd.f32 %v3025, %v3164
  %v3285 = vadd.f32 %v3026, %v3166
  %v3286 = vadd.f32 %v3027, %v3168
  %v3287 = vadd.f32 %v3028, %v3170
  %v3288 = vadd.f32 %v3029, %v3172
  %v3289 = vadd.f32 %v3030, %v3174
  %v3290 = vadd.f32 %v3031, %v3176
  %v3291 = vadd.f32 %v3032, %v3178
  %v3292 = vadd.f32 %v3033, %v3180
  %v3293 = vadd.f32 %v3034, %v3182
  %v3294 = vadd.f32 %v3035, %v3184
  %v3295 = vadd.f32 %v3036, %v3186
  %v3296 = vadd.f32 %v3037, %v3188
  %v3297 = vadd.f32 %v3038, %v3190
  %v3298 = vadd.f32 %v3039, %v3192
  %v3299 = vadd.f32 %v3040, %v3194
  %v3300 = vadd.f32 %v3041, %v3196
  %v3301 = vadd.f32 %v3042, %v3198
  %v3302 = vadd.f32 %v3043, %v3200
  %v3303 = vadd.f32 %v3044, %v3202
  %v3304 = vadd.f32 %v3045, %v3204
  %v3305 = vadd.f32 %v3046, %v3206
  %v3306 = vadd.f32 %v3047, %v3208
  %3314 = vrot.lane.b32.xlu0 %v3013, 32
  %v3315 = vpop.permute.xlu0 %3314
  %3316 = vrot.lane.b32.xlu0 %v3014, 32
  %v3317 = vpop.permute.xlu0 %3316
  %3318 = vrot.lane.b32.xlu0 %v3015, 32
  %v3319 = vpop.permute.xlu0 %3318
  %3320 = vrot.lane.b32.xlu0 %v3016, 32
  %v3321 = vpop.permute.xlu0 %3320
  %3322 = vrot.lane.b32.xlu0 %v3017, 32
  %v3323 = vpop.permute.xlu0 %3322
  %3324 = vrot.lane.b32.xlu0 %v3018, 32
  %v3325 = vpop.permute.xlu0 %3324
  %3326 = vrot.lane.b32.xlu0 %v3019, 32
  %v3327 = vpop.permute.xlu0 %3326
  %3328 = vrot.lane.b32.xlu0 %v3020, 32
  %v3329 = vpop.permute.xlu0 %3328
  %3330 = vrot.lane.b32.xlu0 %v3021, 32
  %v3331 = vpop.permute.xlu0 %3330
  %3332 = vrot.lane.b32.xlu0 %v3022, 32
  %v3333 = vpop.permute.xlu0 %3332
  %3334 = vrot.lane.b32.xlu0 %v3023, 32
  %v3335 = vpop.permute.xlu0 %3334
  %3336 = vrot.lane.b32.xlu0 %v3024, 32
  %v3337 = vpop.permute.xlu0 %3336
  %3338 = vrot.lane.b32.xlu0 %v3025, 32
  %v3339 = vpop.permute.xlu0 %3338
  %3340 = vrot.lane.b32.xlu0 %v3026, 32
  %v3341 = vpop.permute.xlu0 %3340
  %3342 = vrot.lane.b32.xlu0 %v3027, 32
  %v3343 = vpop.permute.xlu0 %3342
  %3344 = vrot.lane.b32.xlu0 %v3028, 32
  %v3345 = vpop.permute.xlu0 %3344
  %3346 = vrot.lane.b32.xlu0 %v3029, 32
  %v3347 = vpop.permute.xlu0 %3346
  %3348 = vrot.lane.b32.xlu0 %v3030, 32
  %v3349 = vpop.permute.xlu0 %3348
  %3350 = vrot.lane.b32.xlu0 %v3031, 32
  %v3351 = vpop.permute.xlu0 %3350
  %3352 = vrot.lane.b32.xlu0 %v3032, 32
  %v3353 = vpop.permute.xlu0 %3352
  %3354 = vrot.lane.b32.xlu0 %v3033, 32
  %v3355 = vpop.permute.xlu0 %3354
  %3356 = vrot.lane.b32.xlu0 %v3034, 32
  %v3357 = vpop.permute.xlu0 %3356
  %3358 = vrot.lane.b32.xlu0 %v3035, 32
  %v3359 = vpop.permute.xlu0 %3358
  %3360 = vrot.lane.b32.xlu0 %v3036, 32
  %v3361 = vpop.permute.xlu0 %3360
  %3362 = vrot.lane.b32.xlu0 %v3037, 32
  %v3363 = vpop.permute.xlu0 %3362
  %3364 = vrot.lane.b32.xlu0 %v3038, 32
  %v3365 = vpop.permute.xlu0 %3364
  %3366 = vrot.lane.b32.xlu0 %v3039, 32
  %v3367 = vpop.permute.xlu0 %3366
  %3368 = vrot.lane.b32.xlu0 %v3040, 32
  %v3369 = vpop.permute.xlu0 %3368
  %3370 = vrot.lane.b32.xlu0 %v3041, 32
  %v3371 = vpop.permute.xlu0 %3370
  %3372 = vrot.lane.b32.xlu0 %v3042, 32
  %v3373 = vpop.permute.xlu0 %3372
  %3374 = vrot.lane.b32.xlu0 %v3043, 32
  %v3375 = vpop.permute.xlu0 %3374
  %3376 = vrot.lane.b32.xlu0 %v3044, 32
  %v3377 = vpop.permute.xlu0 %3376
  %3378 = vrot.lane.b32.xlu0 %v3045, 32
  %v3379 = vpop.permute.xlu0 %3378
  %3380 = vrot.lane.b32.xlu0 %v3046, 32
  %v3381 = vpop.permute.xlu0 %3380
  %3382 = vrot.lane.b32.xlu0 %v3047, 32
  %v3383 = vpop.permute.xlu0 %3382
  %3384 = vrot.lane.b32.xlu0 %v3048, 32
  %v3385 = vpop.permute.xlu0 %3384
  %3386 = vrot.lane.b32.xlu0 %v3049, 32
  %v3387 = vpop.permute.xlu0 %3386
  %3388 = vrot.lane.b32.xlu0 %v3050, 32
  %v3389 = vpop.permute.xlu0 %3388
  %3390 = vrot.lane.b32.xlu0 %v3051, 32
  %v3391 = vpop.permute.xlu0 %3390
  %3392 = vrot.lane.b32.xlu0 %v3052, 32
  %v3393 = vpop.permute.xlu0 %3392
  %3394 = vrot.lane.b32.xlu0 %v3053, 32
  %v3395 = vpop.permute.xlu0 %3394
  %3396 = vrot.lane.b32.xlu0 %v3054, 32
  %v3397 = vpop.permute.xlu0 %3396
  %3398 = vrot.lane.b32.xlu0 %v3055, 32
  %v3399 = vpop.permute.xlu0 %3398
  %3400 = vrot.lane.b32.xlu0 %v3056, 32
  %v3401 = vpop.permute.xlu0 %3400
  %3402 = vrot.lane.b32.xlu0 %v3057, 32
  %v3403 = vpop.permute.xlu0 %3402
  %3404 = vrot.lane.b32.xlu0 %v3058, 32
  %v3405 = vpop.permute.xlu0 %3404
  %3406 = vrot.lane.b32.xlu0 %v3059, 32
  %v3407 = vpop.permute.xlu0 %3406
  %3408 = vrot.lane.b32.xlu0 %v3060, 32
  %v3409 = vpop.permute.xlu0 %3408
  %3410 = vrot.lane.b32.xlu0 %v3061, 32
  %v3411 = vpop.permute.xlu0 %3410
  %v3412 = vrot.slane %v3315, 1
  %v3413 = vrot.slane %v3317, 1
  %v3414 = vrot.slane %v3319, 1
  %v3415 = vrot.slane %v3321, 1
  %v3416 = vrot.slane %v3323, 1
  %v3417 = vrot.slane %v3325, 1
  %v3418 = vrot.slane %v3327, 1
  %v3419 = vrot.slane %v3329, 1
  %v3420 = vrot.slane %v3331, 1
  %v3421 = vrot.slane %v3333, 1
  %v3422 = vrot.slane %v3335, 1
  %v3423 = vrot.slane %v3337, 1
  %v3424 = vrot.slane %v3339, 1
  %v3425 = vrot.slane %v3341, 1
  %v3426 = vrot.slane %v3343, 1
  %v3427 = vrot.slane %v3345, 1
  %v3428 = vrot.slane %v3347, 1
  %v3429 = vrot.slane %v3349, 1
  %v3430 = vrot.slane %v3351, 1
  %v3431 = vrot.slane %v3353, 1
  %v3432 = vrot.slane %v3355, 1
  %v3433 = vrot.slane %v3357, 1
  %v3434 = vrot.slane %v3359, 1
  %v3435 = vrot.slane %v3361, 1
  %v3436 = vrot.slane %v3363, 1
  %v3437 = vrot.slane %v3365, 1
  %v3438 = vrot.slane %v3367, 1
  %v3439 = vrot.slane %v3369, 1
  %v3440 = vrot.slane %v3371, 1
  %v3441 = vrot.slane %v3373, 1
  %v3442 = vrot.slane %v3375, 1
  %v3443 = vrot.slane %v3377, 1
  %v3444 = vrot.slane %v3379, 1
  %v3445 = vrot.slane %v3381, 1
  %v3446 = vrot.slane %v3383, 1
  %v3447 = vrot.slane %v3385, 1
  %v3448 = vrot.slane %v3387, 1
  %v3449 = vrot.slane %v3389, 1
  %v3450 = vrot.slane %v3391, 1
  %v3451 = vrot.slane %v3393, 1
  %v3452 = vrot.slane %v3395, 1
  %v3453 = vrot.slane %v3397, 1
  %v3454 = vrot.slane %v3399, 1
  %v3455 = vrot.slane %v3401, 1
  %v3456 = vrot.slane %v3403, 1
  %v3457 = vrot.slane %v3405, 1
  %v3458 = vrot.slane %v3407, 1
  %v3459 = vrot.slane %v3409, 1
  %v3460 = vrot.slane %v3411, 1
  %vm3461 = vcmask 261120
  %v3462 = vsel %vm3461, %v3315, %v3412
  %v3463 = vsel %vm3461, %v3317, %v3413
  %v3464 = vsel %vm3461, %v3319, %v3414
  %v3465 = vsel %vm3461, %v3321, %v3415
  %v3466 = vsel %vm3461, %v3323, %v3416
  %v3467 = vsel %vm3461, %v3325, %v3417
  %v3468 = vsel %vm3461, %v3327, %v3418
  %v3469 = vsel %vm3461, %v3329, %v3419
  %v3470 = vsel %vm3461, %v3331, %v3420
  %v3471 = vsel %vm3461, %v3333, %v3421
  %v3472 = vsel %vm3461, %v3335, %v3422
  %v3473 = vsel %vm3461, %v3337, %v3423
  %v3474 = vsel %vm3461, %v3339, %v3424
  %v3475 = vsel %vm3461, %v3341, %v3425
  %v3476 = vsel %vm3461, %v3343, %v3426
  %v3477 = vsel %vm3461, %v3345, %v3427
  %v3478 = vsel %vm3461, %v3347, %v3428
  %v3479 = vsel %vm3461, %v3349, %v3429
  %v3480 = vsel %vm3461, %v3351, %v3430
  %v3481 = vsel %vm3461, %v3353, %v3431
  %v3482 = vsel %vm3461, %v3355, %v3432
  %v3483 = vsel %vm3461, %v3357, %v3433
  %v3484 = vsel %vm3461, %v3359, %v3434
  %v3485 = vsel %vm3461, %v3361, %v3435
  %v3486 = vsel %vm3461, %v3363, %v3436
  %v3487 = vsel %vm3461, %v3365, %v3437
  %v3488 = vsel %vm3461, %v3367, %v3438
  %v3489 = vsel %vm3461, %v3369, %v3439
  %v3490 = vsel %vm3461, %v3371, %v3440
  %v3491 = vsel %vm3461, %v3373, %v3441
  %v3492 = vsel %vm3461, %v3375, %v3442
  %v3493 = vsel %vm3461, %v3377, %v3443
  %v3494 = vsel %vm3461, %v3379, %v3444
  %v3495 = vsel %vm3461, %v3381, %v3445
  %v3496 = vsel %vm3461, %v3383, %v3446
  %v3497 = vsel %vm3461, %v3385, %v3447
  %v3498 = vsel %vm3461, %v3387, %v3448
  %v3499 = vsel %vm3461, %v3389, %v3449
  %v3500 = vsel %vm3461, %v3391, %v3450
  %v3501 = vsel %vm3461, %v3393, %v3451
  %v3502 = vsel %vm3461, %v3395, %v3452
  %v3503 = vsel %vm3461, %v3397, %v3453
  %v3504 = vsel %vm3461, %v3399, %v3454
  %v3505 = vsel %vm3461, %v3401, %v3455
  %v3506 = vsel %vm3461, %v3403, %v3456
  %v3507 = vsel %vm3461, %v3405, %v3457
  %v3508 = vsel %vm3461, %v3407, %v3458
  %v3509 = vsel %vm3461, %v3409, %v3459
  %v3510 = vsel %vm3461, %v3411, %v3460
  %v3560 = vadd.f32 %v3258, %v3462
  %v3561 = vadd.f32 %v3259, %v3463
  %v3562 = vadd.f32 %v3260, %v3464
  %v3563 = vadd.f32 %v3261, %v3465
  %v3564 = vadd.f32 %v3262, %v3466
  %v3565 = vadd.f32 %v3263, %v3467
  %v3566 = vadd.f32 %v3264, %v3468
  %v3567 = vadd.f32 %v3265, %v3469
  %v3568 = vadd.f32 %v3266, %v3470
  %v3569 = vadd.f32 %v3267, %v3471
  %v3570 = vadd.f32 %v3268, %v3472
  %v3571 = vadd.f32 %v3269, %v3473
  %v3572 = vadd.f32 %v3270, %v3474
  %v3573 = vadd.f32 %v3271, %v3475
  %v3574 = vadd.f32 %v3272, %v3476
  %v3575 = vadd.f32 %v3273, %v3477
  %v3576 = vadd.f32 %v3274, %v3478
  %v3577 = vadd.f32 %v3275, %v3479
  %v3578 = vadd.f32 %v3276, %v3480
  %v3579 = vadd.f32 %v3277, %v3481
  %v3580 = vadd.f32 %v3278, %v3482
  %v3581 = vadd.f32 %v3279, %v3483
  %v3582 = vadd.f32 %v3280, %v3484
  %v3583 = vadd.f32 %v3281, %v3485
  %v3584 = vadd.f32 %v3282, %v3486
  %v3585 = vadd.f32 %v3283, %v3487
  %v3586 = vadd.f32 %v3284, %v3488
  %v3587 = vadd.f32 %v3285, %v3489
  %v3588 = vadd.f32 %v3286, %v3490
  %v3589 = vadd.f32 %v3287, %v3491
  %v3590 = vadd.f32 %v3288, %v3492
  %v3591 = vadd.f32 %v3289, %v3493
  %v3592 = vadd.f32 %v3290, %v3494
  %v3593 = vadd.f32 %v3291, %v3495
  %v3594 = vadd.f32 %v3292, %v3496
  %v3595 = vadd.f32 %v3293, %v3497
  %v3596 = vadd.f32 %v3294, %v3498
  %v3597 = vadd.f32 %v3295, %v3499
  %v3598 = vadd.f32 %v3296, %v3500
  %v3599 = vadd.f32 %v3297, %v3501
  %v3600 = vadd.f32 %v3298, %v3502
  %v3601 = vadd.f32 %v3299, %v3503
  %v3602 = vadd.f32 %v3300, %v3504
  %v3603 = vadd.f32 %v3301, %v3505
  %v3604 = vadd.f32 %v3302, %v3506
  %v3605 = vadd.f32 %v3303, %v3507
  %v3606 = vadd.f32 %v3304, %v3508
  %v3607 = vadd.f32 %v3305, %v3509
  %v3608 = vadd.f32 %v3306, %v3510
  %v3658 = vcombine.low %v3560, %v3561
  %v3659 = vcombine.low %v3562, %v3563
  %v3660 = vcombine.low %v3564, %v3565
  %v3662 = vunpack.c.l.s4 1966171168
  %v3663 = vunpack.c.0.s8 %v3662
  %v3664 = vlaneseq
  %v3665 = vshrl.u32 %v3664, 7
  %v3666 = vsub.s32 %v3663, %v3665
  %v3667 = vrot.slane %v3658, %v3666
  %v3669 = vunpack.c.l.s4 1966171168
  %v3670 = vunpack.c.0.s8 %v3669
  %v3671 = vlaneseq
  %v3672 = vshrl.u32 %v3671, 7
  %v3673 = vsub.s32 %v3670, %v3672
  %v3674 = vrot.slane %v3659, %v3673
  %v3676 = vunpack.c.l.s4 1966171168
  %v3677 = vunpack.c.0.s8 %v3676
  %v3678 = vlaneseq
  %v3679 = vshrl.u32 %v3678, 7
  %v3680 = vsub.s32 %v3677, %v3679
  %v3681 = vrot.slane %v3660, %v3680
  %v3683 = vunpack.c.l.s4 1966171168
  %v3684 = vunpack.c.0.s8 %v3683
  %v3685 = vlaneseq
  %v3686 = vshrl.u32 %v3685, 7
  %v3687 = vsub.s32 %v3684, %v3686
  %v3688 = vrot.slane %v3566, %v3687
  %v3689 = vcombine.low %v3667, %v3674
  %v3690 = vcombine.low %v3681, %v3688
  %v3692 = vunpack.c.l.s4 1966171168
  %v3693 = vunpack.c.0.s8 %v3692
  %v3694 = vlaneseq
  %v3695 = vshrl.u32 %v3694, 7
  %v3696 = vsub.s32 %v3693, %v3695
  %v3697 = vrot.slane %v3689, %v3696
  %v3699 = vunpack.c.l.s4 1966171168
  %v3700 = vunpack.c.0.s8 %v3699
  %v3701 = vlaneseq
  %v3702 = vshrl.u32 %v3701, 7
  %v3703 = vsub.s32 %v3700, %v3702
  %v3704 = vrot.slane %v3690, %v3703
  %v3705 = vcombine.low %v3697, %v3704
  %v3706 = vcombine.low %v3567, %v3568
  %v3707 = vcombine.low %v3569, %v3570
  %v3708 = vcombine.low %v3571, %v3572
  %v3710 = vunpack.c.l.s4 1966171168
  %v3711 = vunpack.c.0.s8 %v3710
  %v3712 = vlaneseq
  %v3713 = vshrl.u32 %v3712, 7
  %v3714 = vsub.s32 %v3711, %v3713
  %v3715 = vrot.slane %v3706, %v3714
  %v3717 = vunpack.c.l.s4 1966171168
  %v3718 = vunpack.c.0.s8 %v3717
  %v3719 = vlaneseq
  %v3720 = vshrl.u32 %v3719, 7
  %v3721 = vsub.s32 %v3718, %v3720
  %v3722 = vrot.slane %v3707, %v3721
  %v3724 = vunpack.c.l.s4 1966171168
  %v3725 = vunpack.c.0.s8 %v3724
  %v3726 = vlaneseq
  %v3727 = vshrl.u32 %v3726, 7
  %v3728 = vsub.s32 %v3725, %v3727
  %v3729 = vrot.slane %v3708, %v3728
  %v3731 = vunpack.c.l.s4 1966171168
  %v3732 = vunpack.c.0.s8 %v3731
  %v3733 = vlaneseq
  %v3734 = vshrl.u32 %v3733, 7
  %v3735 = vsub.s32 %v3732, %v3734
  %v3736 = vrot.slane %v3573, %v3735
  %v3737 = vcombine.low %v3715, %v3722
  %v3738 = vcombine.low %v3729, %v3736
  %v3740 = vunpack.c.l.s4 1966171168
  %v3741 = vunpack.c.0.s8 %v3740
  %v3742 = vlaneseq
  %v3743 = vshrl.u32 %v3742, 7
  %v3744 = vsub.s32 %v3741, %v3743
  %v3745 = vrot.slane %v3737, %v3744
  %v3747 = vunpack.c.l.s4 1966171168
  %v3748 = vunpack.c.0.s8 %v3747
  %v3749 = vlaneseq
  %v3750 = vshrl.u32 %v3749, 7
  %v3751 = vsub.s32 %v3748, %v3750
  %v3752 = vrot.slane %v3738, %v3751
  %v3753 = vcombine.low %v3745, %v3752
  %v3754 = vcombine.low %v3574, %v3575
  %v3755 = vcombine.low %v3576, %v3577
  %v3756 = vcombine.low %v3578, %v3579
  %v3758 = vunpack.c.l.s4 1966171168
  %v3759 = vunpack.c.0.s8 %v3758
  %v3760 = vlaneseq
  %v3761 = vshrl.u32 %v3760, 7
  %v3762 = vsub.s32 %v3759, %v3761
  %v3763 = vrot.slane %v3754, %v3762
  %v3765 = vunpack.c.l.s4 1966171168
  %v3766 = vunpack.c.0.s8 %v3765
  %v3767 = vlaneseq
  %v3768 = vshrl.u32 %v3767, 7
  %v3769 = vsub.s32 %v3766, %v3768
  %v3770 = vrot.slane %v3755, %v3769
  %v3772 = vunpack.c.l.s4 1966171168
  %v3773 = vunpack.c.0.s8 %v3772
  %v3774 = vlaneseq
  %v3775 = vshrl.u32 %v3774, 7
  %v3776 = vsub.s32 %v3773, %v3775
  %v3777 = vrot.slane %v3756, %v3776
  %v3779 = vunpack.c.l.s4 1966171168
  %v3780 = vunpack.c.0.s8 %v3779
  %v3781 = vlaneseq
  %v3782 = vshrl.u32 %v3781, 7
  %v3783 = vsub.s32 %v3780, %v3782
  %v3784 = vrot.slane %v3580, %v3783
  %v3785 = vcombine.low %v3763, %v3770
  %v3786 = vcombine.low %v3777, %v3784
  %v3788 = vunpack.c.l.s4 1966171168
  %v3789 = vunpack.c.0.s8 %v3788
  %v3790 = vlaneseq
  %v3791 = vshrl.u32 %v3790, 7
  %v3792 = vsub.s32 %v3789, %v3791
  %v3793 = vrot.slane %v3785, %v3792
  %v3795 = vunpack.c.l.s4 1966171168
  %v3796 = vunpack.c.0.s8 %v3795
  %v3797 = vlaneseq
  %v3798 = vshrl.u32 %v3797, 7
  %v3799 = vsub.s32 %v3796, %v3798
  %v3800 = vrot.slane %v3786, %v3799
  %v3801 = vcombine.low %v3793, %v3800
  %v3802 = vcombine.low %v3581, %v3582
  %v3803 = vcombine.low %v3583, %v3584
  %v3804 = vcombine.low %v3585, %v3586
  %v3806 = vunpack.c.l.s4 1966171168
  %v3807 = vunpack.c.0.s8 %v3806
  %v3808 = vlaneseq
  %v3809 = vshrl.u32 %v3808, 7
  %v3810 = vsub.s32 %v3807, %v3809
  %v3811 = vrot.slane %v3802, %v3810
  %v3813 = vunpack.c.l.s4 1966171168
  %v3814 = vunpack.c.0.s8 %v3813
  %v3815 = vlaneseq
  %v3816 = vshrl.u32 %v3815, 7
  %v3817 = vsub.s32 %v3814, %v3816
  %v3818 = vrot.slane %v3803, %v3817
  %v3820 = vunpack.c.l.s4 1966171168
  %v3821 = vunpack.c.0.s8 %v3820
  %v3822 = vlaneseq
  %v3823 = vshrl.u32 %v3822, 7
  %v3824 = vsub.s32 %v3821, %v3823
  %v3825 = vrot.slane %v3804, %v3824
  %v3827 = vunpack.c.l.s4 1966171168
  %v3828 = vunpack.c.0.s8 %v3827
  %v3829 = vlaneseq
  %v3830 = vshrl.u32 %v3829, 7
  %v3831 = vsub.s32 %v3828, %v3830
  %v3832 = vrot.slane %v3587, %v3831
  %v3833 = vcombine.low %v3811, %v3818
  %v3834 = vcombine.low %v3825, %v3832
  %v3836 = vunpack.c.l.s4 1966171168
  %v3837 = vunpack.c.0.s8 %v3836
  %v3838 = vlaneseq
  %v3839 = vshrl.u32 %v3838, 7
  %v3840 = vsub.s32 %v3837, %v3839
  %v3841 = vrot.slane %v3833, %v3840
  %v3843 = vunpack.c.l.s4 1966171168
  %v3844 = vunpack.c.0.s8 %v3843
  %v3845 = vlaneseq
  %v3846 = vshrl.u32 %v3845, 7
  %v3847 = vsub.s32 %v3844, %v3846
  %v3848 = vrot.slane %v3834, %v3847
  %v3849 = vcombine.low %v3841, %v3848
  %v3850 = vcombine.low %v3588, %v3589
  %v3851 = vcombine.low %v3590, %v3591
  %v3852 = vcombine.low %v3592, %v3593
  %v3854 = vunpack.c.l.s4 1966171168
  %v3855 = vunpack.c.0.s8 %v3854
  %v3856 = vlaneseq
  %v3857 = vshrl.u32 %v3856, 7
  %v3858 = vsub.s32 %v3855, %v3857
  %v3859 = vrot.slane %v3850, %v3858
  %v3861 = vunpack.c.l.s4 1966171168
  %v3862 = vunpack.c.0.s8 %v3861
  %v3863 = vlaneseq
  %v3864 = vshrl.u32 %v3863, 7
  %v3865 = vsub.s32 %v3862, %v3864
  %v3866 = vrot.slane %v3851, %v3865
  %v3868 = vunpack.c.l.s4 1966171168
  %v3869 = vunpack.c.0.s8 %v3868
  %v3870 = vlaneseq
  %v3871 = vshrl.u32 %v3870, 7
  %v3872 = vsub.s32 %v3869, %v3871
  %v3873 = vrot.slane %v3852, %v3872
  %v3875 = vunpack.c.l.s4 1966171168
  %v3876 = vunpack.c.0.s8 %v3875
  %v3877 = vlaneseq
  %v3878 = vshrl.u32 %v3877, 7
  %v3879 = vsub.s32 %v3876, %v3878
  %v3880 = vrot.slane %v3594, %v3879
  %v3881 = vcombine.low %v3859, %v3866
  %v3882 = vcombine.low %v3873, %v3880
  %v3884 = vunpack.c.l.s4 1966171168
  %v3885 = vunpack.c.0.s8 %v3884
  %v3886 = vlaneseq
  %v3887 = vshrl.u32 %v3886, 7
  %v3888 = vsub.s32 %v3885, %v3887
  %v3889 = vrot.slane %v3881, %v3888
  %v3891 = vunpack.c.l.s4 1966171168
  %v3892 = vunpack.c.0.s8 %v3891
  %v3893 = vlaneseq
  %v3894 = vshrl.u32 %v3893, 7
  %v3895 = vsub.s32 %v3892, %v3894
  %v3896 = vrot.slane %v3882, %v3895
  %v3897 = vcombine.low %v3889, %v3896
  %v3898 = vcombine.low %v3595, %v3596
  %v3899 = vcombine.low %v3597, %v3598
  %v3900 = vcombine.low %v3599, %v3600
  %v3902 = vunpack.c.l.s4 1966171168
  %v3903 = vunpack.c.0.s8 %v3902
  %v3904 = vlaneseq
  %v3905 = vshrl.u32 %v3904, 7
  %v3906 = vsub.s32 %v3903, %v3905
  %v3907 = vrot.slane %v3898, %v3906
  %v3909 = vunpack.c.l.s4 1966171168
  %v3910 = vunpack.c.0.s8 %v3909
  %v3911 = vlaneseq
  %v3912 = vshrl.u32 %v3911, 7
  %v3913 = vsub.s32 %v3910, %v3912
  %v3914 = vrot.slane %v3899, %v3913
  %v3916 = vunpack.c.l.s4 1966171168
  %v3917 = vunpack.c.0.s8 %v3916
  %v3918 = vlaneseq
  %v3919 = vshrl.u32 %v3918, 7
  %v3920 = vsub.s32 %v3917, %v3919
  %v3921 = vrot.slane %v3900, %v3920
  %v3923 = vunpack.c.l.s4 1966171168
  %v3924 = vunpack.c.0.s8 %v3923
  %v3925 = vlaneseq
  %v3926 = vshrl.u32 %v3925, 7
  %v3927 = vsub.s32 %v3924, %v3926
  %v3928 = vrot.slane %v3601, %v3927
  %v3929 = vcombine.low %v3907, %v3914
  %v3930 = vcombine.low %v3921, %v3928
  %v3932 = vunpack.c.l.s4 1966171168
  %v3933 = vunpack.c.0.s8 %v3932
  %v3934 = vlaneseq
  %v3935 = vshrl.u32 %v3934, 7
  %v3936 = vsub.s32 %v3933, %v3935
  %v3937 = vrot.slane %v3929, %v3936
  %v3939 = vunpack.c.l.s4 1966171168
  %v3940 = vunpack.c.0.s8 %v3939
  %v3941 = vlaneseq
  %v3942 = vshrl.u32 %v3941, 7
  %v3943 = vsub.s32 %v3940, %v3942
  %v3944 = vrot.slane %v3930, %v3943
  %v3945 = vcombine.low %v3937, %v3944
  %v3946 = vcombine.low %v3602, %v3603
  %v3947 = vcombine.low %v3604, %v3605
  %v3948 = vcombine.low %v3606, %v3607
  %v3950 = vunpack.c.l.s4 1966171168
  %v3951 = vunpack.c.0.s8 %v3950
  %v3952 = vlaneseq
  %v3953 = vshrl.u32 %v3952, 7
  %v3954 = vsub.s32 %v3951, %v3953
  %v3955 = vrot.slane %v3946, %v3954
  %v3957 = vunpack.c.l.s4 1966171168
  %v3958 = vunpack.c.0.s8 %v3957
  %v3959 = vlaneseq
  %v3960 = vshrl.u32 %v3959, 7
  %v3961 = vsub.s32 %v3958, %v3960
  %v3962 = vrot.slane %v3947, %v3961
  %v3964 = vunpack.c.l.s4 1966171168
  %v3965 = vunpack.c.0.s8 %v3964
  %v3966 = vlaneseq
  %v3967 = vshrl.u32 %v3966, 7
  %v3968 = vsub.s32 %v3965, %v3967
  %v3969 = vrot.slane %v3948, %v3968
  %v3971 = vunpack.c.l.s4 1966171168
  %v3972 = vunpack.c.0.s8 %v3971
  %v3973 = vlaneseq
  %v3974 = vshrl.u32 %v3973, 7
  %v3975 = vsub.s32 %v3972, %v3974
  %v3976 = vrot.slane %v3608, %v3975
  %v3977 = vcombine.low %v3955, %v3962
  %v3978 = vcombine.low %v3969, %v3976
  %v3980 = vunpack.c.l.s4 1966171168
  %v3981 = vunpack.c.0.s8 %v3980
  %v3982 = vlaneseq
  %v3983 = vshrl.u32 %v3982, 7
  %v3984 = vsub.s32 %v3981, %v3983
  %v3985 = vrot.slane %v3977, %v3984
  %v3987 = vunpack.c.l.s4 1966171168
  %v3988 = vunpack.c.0.s8 %v3987
  %v3989 = vlaneseq
  %v3990 = vshrl.u32 %v3989, 7
  %v3991 = vsub.s32 %v3988, %v3990
  %v3992 = vrot.slane %v3978, %v3991
  %v3993 = vcombine.low %v3985, %v3992
  %vm4001 = vcmask 391168
  %4002 = vst.msk [vmem:[%s2] sm:$0x7f] %vm4001, %v3705
  %4003 = vst.msk [vmem:[%s2 + $0x8] sm:$0x7f] %vm4001, %v3753
  %4004 = vst.msk [vmem:[%s2 + $0x10] sm:$0x7f] %vm4001, %v3801
  %4005 = vst.msk [vmem:[%s2 + $0x18] sm:$0x7f] %vm4001, %v3849
  %4006 = vst.msk [vmem:[%s2 + $0x20] sm:$0x7f] %vm4001, %v3897
  %4007 = vst.msk [vmem:[%s2 + $0x28] sm:$0x7f] %vm4001, %v3945
  %4008 = vst.msk [vmem:[%s2 + $0x30] sm:$0x7f] %vm4001, %v3993
  // Predicated region
  $region10: #{relu_conv2d.1} parent=0 // pred_check
    _
  $region11: #{relu_conv2d.1} parent=0 // pred_check_branch
    %4010 = sbr.rel (0) target = $region13
  $region12: #{relu_conv2d.1} parent=0 // pred_region
    _
  $region13: #{relu_conv2d.1} parent=0 // pred_fallthru
    _
  // Predicated region
  $region14: #{relu_conv2d.1} parent=0 // pred_check
    _
  $region15: #{relu_conv2d.1} parent=0 // pred_check_branch
    %4012 = sbr.rel (0) target = $region17
  $region16: #{relu_conv2d.1} parent=0 // pred_region
    _
  $region17: #{relu_conv2d.1} parent=0 // pred_fallthru
    _

</llo_original>
